<compile_context>
chip_gen: v7x
topology: tpu7x:2x2x1
jax: 0.10.0
libtpu: 0.0.40
codegen_flags: <defaults>
</compile_context>

<pallas_src>
import jax
import jax.numpy as jnp
from jax import lax
from jax.experimental import pallas as pl
from jax.experimental.pallas import tpu as pltpu


def _upsample_kernel(x_ref, w_ref, b_ref, o_ref, xp_scr):
    """One (batch, row-phase) step.

    x_ref : (H, W, Cin)      bf16  un-padded NHWC input, one batch element
    w_ref : (6*Cin, 2*Cout)  bf16  fused (6 shifted views x Cin) -> (px, cout)
    b_ref : (1, 1, 2*Cout)   f32   column-phase tiled bias
    o_ref : (H, 1, W, 2*Cout)      output slab for this row phase
    xp_scr: (H+2, W+2, Cin)  bf16  VMEM zero-padded staging buffer
    """
    H, W, Cin = x_ref.shape
    C2 = o_ref.shape[-1]
    py = pl.program_id(1)                      # output row phase in {0, 1}

    # Zero-pad inside the kernel (no jnp.pad HBM pass in the wrapper).
    # Re-zero every step so correctness holds when the parallel grid axes are
    # sharded across TensorCores (each core has its own scratch).
    xp_scr[...] = jnp.zeros_like(xp_scr)
    xp_scr[1:H + 1, 1:W + 1, :] = x_ref[...]

    # Fuse all taps of this row phase into one contraction: 6 shifted views
    # (row offsets {py, py+1} x column offsets {0, 1, 2}), concatenated on the
    # channel (contraction) axis.
    views = [xp_scr[pl.ds(py + dr, H), cv:cv + W, :]
             for dr in range(2) for cv in range(3)]
    slab = jnp.concatenate(views, axis=-1)             # (H, W, 6*Cin) bf16
    slab = slab.reshape(H * W, 6 * Cin)

    # Single bf16 MXU matmul per step; f32 accumulation.
    y = jnp.dot(slab, w_ref[...], preferred_element_type=jnp.float32)
    y = y.reshape(H, W, C2) + b_ref[...]               # f32 bias add (VPU)

    # Output lanes are already (px, cout)-interleaved -> one dense store.
    o_ref[...] = y[:, None, :, :].astype(o_ref.dtype)


def _pack_weights(w_pt):
    """(Cin, Cout, 4, 4) torch ConvTranspose2d weight -> (2, 6*Cin, 2*Cout).

    For row phase py, view (dr, cv) and column phase px the kernel tap is
      ty = 1 - dr, tx = 1 + px - cv (valid iff tx in {0,1}),
      ky = 2*ty + 1 - py = 3 - 2*dr - py,   kx = 2*tx + 1 - px = 3 + px - 2*cv.
    Invalid (view, px) pairs get a zero block.
    """
    Cin, Cout = w_pt.shape[0], w_pt.shape[1]
    zeros = jnp.zeros((Cin, Cout), w_pt.dtype)
    slabs = []
    for py in range(2):
        blocks = []
        for dr in range(2):              # extra row offset on top of py
            for cv in range(3):          # padded column offset
                cols = []
                for px in range(2):      # output column phase
                    tx = 1 + px - cv
                    if 0 <= tx <= 1:
                        ky = 3 - 2 * dr - py
                        kx = 3 + px - 2 * cv
                        cols.append(w_pt[:, :, ky, kx])
                    else:
                        cols.append(zeros)
                blocks.append(jnp.concatenate(cols, axis=1))   # (Cin, 2*Cout)
        slabs.append(jnp.concatenate(blocks, axis=0))          # (6*Cin, 2*Cout)
    return jnp.stack(slabs, axis=0)                            # (2, 6*Cin, 2*Cout)


def conv_transpose2d_upsample(x_nchw, w_pt, b):
    """x_nchw: (N, Cin, H, W); w_pt: (Cin, Cout, 4, 4); b: (Cout,).
    Returns (N, Cout, 2H, 2W) — same semantics as nn.ConvTranspose2d(C, C//2, 4, 2, 1)."""
    N, Cin, H, W = x_nchw.shape
    Cout = w_pt.shape[1]
    C2 = 2 * Cout

    # TODO(synk): if the surrounding model carries NHWC, drop both transposes.
    x = jnp.transpose(x_nchw, (0, 2, 3, 1)).astype(jnp.bfloat16)   # NHWC bf16
    w6 = _pack_weights(w_pt).astype(jnp.bfloat16)                  # (2, 6Cin, 2Cout)
    b3 = jnp.tile(b.astype(jnp.float32), 2).reshape(1, 1, C2)      # (1,1,2Cout) f32

    out = pl.pallas_call(
        _upsample_kernel,
        out_shape=jax.ShapeDtypeStruct((N, H, 2, W, C2), x_nchw.dtype),
        grid=(N, 2),
        in_specs=[
            pl.BlockSpec((None, H, W, Cin), lambda n, p: (n, 0, 0, 0)),
            pl.BlockSpec((None, 6 * Cin, C2), lambda n, p: (p, 0, 0)),
            pl.BlockSpec((1, 1, C2), lambda n, p: (0, 0, 0)),
        ],
        out_specs=pl.BlockSpec((None, H, 1, W, C2),
                               lambda n, p: (n, 0, p, 0, 0)),
        scratch_shapes=[pltpu.VMEM((H + 2, W + 2, Cin), jnp.bfloat16)],
        compiler_params=pltpu.CompilerParams(
            dimension_semantics=("parallel", "parallel")),
    )(x, w6, b3)

    # (N, H, 2, W, 2*Cout) is row-major identical to NHWC (N, 2H, 2W, Cout):
    # the reshape below is free (no HBM pass).
    out = out.reshape(N, 2 * H, 2 * W, Cout)
    return jnp.transpose(out, (0, 3, 1, 2))                        # back to NCHW


def _ref_conv_transpose2d(x, w_pt, b, operand_dtype=jnp.float32):
    """Pure-JAX reference (fractionally-strided conv, matches PyTorch).
    operand_dtype=bf16 mirrors the kernel's MXU quantization (f32 accum)."""
    w_f = jnp.transpose(w_pt, (1, 0, 2, 3))[:, :, ::-1, ::-1]   # (Cout, Cin, 4, 4)
    y = lax.conv_general_dilated(
        x.astype(operand_dtype), w_f.astype(operand_dtype),
        window_strides=(1, 1),
        padding=((2, 2), (2, 2)),
        lhs_dilation=(2, 2),
        rhs_dilation=(1, 1),
        dimension_numbers=('NCHW', 'OIHW', 'NCHW'),
        preferred_element_type=jnp.float32)
    return y.astype(jnp.float32) + b.reshape(1, -1, 1, 1).astype(jnp.float32)


if __name__ == "__main__":
    key = jax.random.PRNGKey(0)
    k_x, k_w, k_b = jax.random.split(key, 3)

    N, C, H, W = 2, 4, 16, 16
    Cout = C // 2
    K = 4

    x = jax.random.normal(k_x, (N, C, H, W), dtype=jnp.float32)
    # Deterministic "uniform-like" init of ConvTranspose2d params (synthetic).
    bound = 1.0 / (C * K * K) ** 0.5
    w = jax.random.uniform(k_w, (C, Cout, K, K), jnp.float32, -bound, bound)
    b = jax.random.uniform(k_b, (Cout,), jnp.float32, -bound, bound)

    y = conv_transpose2d_upsample(x, w, b)
    y = jax.block_until_ready(y)
    assert y.shape == (N, Cout, 2 * H, 2 * W), y.shape

    # Tight check vs a reference with matching bf16 operand quantization
    # (f32 accumulation), plus a loose sanity check vs the full-f32 reference.
    y_ref_bf16 = _ref_conv_transpose2d(x, w, b, operand_dtype=jnp.bfloat16)
    y_ref_f32 = _ref_conv_transpose2d(x, w, b, operand_dtype=jnp.float32)
    assert jnp.allclose(y, y_ref_bf16, rtol=2e-3, atol=2e-3), \
        float(jnp.max(jnp.abs(y - y_ref_bf16)))
    assert jnp.allclose(y, y_ref_f32, rtol=1e-1, atol=1e-1), \
        float(jnp.max(jnp.abs(y - y_ref_f32)))

    print("KERNEL_OK")
</pallas_src>

<mosaic_0001>
module attributes {stable_mosaic.version = 11 : i64} {
  func.func @_upsample_kernel(%arg0: i32, %arg1: i32, %arg2: memref<1x16x16x4xbf16, #tpu.memory_space<vmem>>, %arg3: memref<1x24x4xbf16, #tpu.memory_space<vmem>>, %arg4: memref<1x1x4xf32, #tpu.memory_space<vmem>>, %arg5: memref<1x16x1x16x4xf32, #tpu.memory_space<vmem>>, %arg6: memref<18x18x4xbf16, #tpu.memory_space<vmem>>) attributes {dimension_semantics = [#tpu.dimension_semantics<parallel>, #tpu.dimension_semantics<parallel>], iteration_bounds = array<i64: 2, 2>, scalar_prefetch = 0 : i64, scratch_operands = 1 : i64, tpu.core_type = #tpu.core_type<tc>, window_params = [{transform_indices = @transform_0, window_bounds = array<i64: 1, 16, 16, 4>}, {transform_indices = @transform_1, window_bounds = array<i64: 1, 24, 4>}, {pipeline_mode = #tpu.pipeline_mode<synchronous>, transform_indices = @transform_2, window_bounds = array<i64: 1, 1, 4>}, {transform_indices = @transform_3, window_bounds = array<i64: 1, 16, 1, 16, 4>}]} {
    %cst = arith.constant 0.000000e+00 : bf16
    %0 = vector.broadcast %cst : bf16 to vector<18x18x4xbf16>
    %c0 = arith.constant 0 : index
    %c0_0 = arith.constant 0 : index
    %c0_1 = arith.constant 0 : index
    %1 = vector.load %arg6[%c0, %c0_0, %c0_1] : memref<18x18x4xbf16, #tpu.memory_space<vmem>>, vector<18x18x4xbf16>
    tpu.vector_store %arg6[%c0, %c0_0, %c0_1], %0 {strides = array<i32>} : memref<18x18x4xbf16, #tpu.memory_space<vmem>>, vector<18x18x4xbf16>,
    %c0_2 = arith.constant 0 : index
    %c0_3 = arith.constant 0 : index
    %c0_4 = arith.constant 0 : index
    %c0_5 = arith.constant 0 : index
    %2 = vector.load %arg2[%c0_2, %c0_3, %c0_4, %c0_5] : memref<1x16x16x4xbf16, #tpu.memory_space<vmem>>, vector<1x16x16x4xbf16>
    %3 = vector.shape_cast %2 : vector<1x16x16x4xbf16> to vector<16x16x4xbf16>
    %c1 = arith.constant 1 : index
    %c1_6 = arith.constant 1 : index
    %c0_7 = arith.constant 0 : index
    %4 = vector.load %arg6[%c1, %c1_6, %c0_7] : memref<18x18x4xbf16, #tpu.memory_space<vmem>>, vector<16x16x4xbf16>
    tpu.vector_store %arg6[%c1, %c1_6, %c0_7], %3 {strides = array<i32>} : memref<18x18x4xbf16, #tpu.memory_space<vmem>>, vector<16x16x4xbf16>,
    %c0_i32 = arith.constant 0 : i32
    %5 = arith.addi %arg1, %c0_i32 : i32
    %6 = arith.index_cast %5 : i32 to index
    %c0_8 = arith.constant 0 : index
    %c0_9 = arith.constant 0 : index
    %7 = vector.load %arg6[%6, %c0_8, %c0_9] : memref<18x18x4xbf16, #tpu.memory_space<vmem>>, vector<16x16x4xbf16>
    %c0_i32_10 = arith.constant 0 : i32
    %8 = arith.addi %arg1, %c0_i32_10 : i32
    %9 = arith.index_cast %8 : i32 to index
    %c1_11 = arith.constant 1 : index
    %c0_12 = arith.constant 0 : index
    %10 = vector.load %arg6[%9, %c1_11, %c0_12] : memref<18x18x4xbf16, #tpu.memory_space<vmem>>, vector<16x16x4xbf16>
    %c0_i32_13 = arith.constant 0 : i32
    %11 = arith.addi %arg1, %c0_i32_13 : i32
    %12 = arith.index_cast %11 : i32 to index
    %c2 = arith.constant 2 : index
    %c0_14 = arith.constant 0 : index
    %13 = vector.load %arg6[%12, %c2, %c0_14] : memref<18x18x4xbf16, #tpu.memory_space<vmem>>, vector<16x16x4xbf16>
    %c1_i32 = arith.constant 1 : i32
    %14 = arith.addi %arg1, %c1_i32 : i32
    %15 = arith.index_cast %14 : i32 to index
    %c0_15 = arith.constant 0 : index
    %c0_16 = arith.constant 0 : index
    %16 = vector.load %arg6[%15, %c0_15, %c0_16] : memref<18x18x4xbf16, #tpu.memory_space<vmem>>, vector<16x16x4xbf16>
    %c1_i32_17 = arith.constant 1 : i32
    %17 = arith.addi %arg1, %c1_i32_17 : i32
    %18 = arith.index_cast %17 : i32 to index
    %c1_18 = arith.constant 1 : index
    %c0_19 = arith.constant 0 : index
    %19 = vector.load %arg6[%18, %c1_18, %c0_19] : memref<18x18x4xbf16, #tpu.memory_space<vmem>>, vector<16x16x4xbf16>
    %c1_i32_20 = arith.constant 1 : i32
    %20 = arith.addi %arg1, %c1_i32_20 : i32
    %21 = arith.index_cast %20 : i32 to index
    %c2_21 = arith.constant 2 : index
    %c0_22 = arith.constant 0 : index
    %22 = vector.load %arg6[%21, %c2_21, %c0_22] : memref<18x18x4xbf16, #tpu.memory_space<vmem>>, vector<16x16x4xbf16>
    %23 = tpu.concatenate %7, %10, %13, %16, %19, %22 in 2 : vector<16x16x4xbf16>, vector<16x16x4xbf16>, vector<16x16x4xbf16>, vector<16x16x4xbf16>, vector<16x16x4xbf16>, vector<16x16x4xbf16> -> vector<16x16x24xbf16>
    %24 = vector.shape_cast %23 : vector<16x16x24xbf16> to vector<256x24xbf16>
    %c0_23 = arith.constant 0 : index
    %c0_24 = arith.constant 0 : index
    %c0_25 = arith.constant 0 : index
    %25 = vector.load %arg3[%c0_23, %c0_24, %c0_25] : memref<1x24x4xbf16, #tpu.memory_space<vmem>>, vector<1x24x4xbf16>
    %26 = vector.shape_cast %25 : vector<1x24x4xbf16> to vector<24x4xbf16>
    %cst_26 = arith.constant dense<0.000000e+00> : vector<256x4xf32>
    %27 = tpu.matmul %24, %26, %cst_26 {dimension_numbers = #tpu.dot_dimension_numbers<[1], [0], [0], [1], [0, 0, 1, 1], [], []>} : vector<256x24xbf16>, vector<24x4xbf16>, vector<256x4xf32> -> vector<256x4xf32>
    %28 = vector.shape_cast %27 : vector<256x4xf32> to vector<16x16x4xf32>
    %c0_27 = arith.constant 0 : index
    %c0_28 = arith.constant 0 : index
    %c0_29 = arith.constant 0 : index
    %29 = vector.load %arg4[%c0_27, %c0_28, %c0_29] : memref<1x1x4xf32, #tpu.memory_space<vmem>>, vector<1x1x4xf32>
    %30 = vector.broadcast %29 : vector<1x1x4xf32> to vector<16x16x4xf32>
    %31 = arith.addf %28, %30 : vector<16x16x4xf32>
    %32 = vector.shape_cast %31 : vector<16x16x4xf32> to vector<16x1x16x4xf32>
    %c0_30 = arith.constant 0 : index
    %c0_31 = arith.constant 0 : index
    %c0_32 = arith.constant 0 : index
    %c0_33 = arith.constant 0 : index
    %c0_34 = arith.constant 0 : index
    %33 = vector.load %arg5[%c0_30, %c0_31, %c0_32, %c0_33, %c0_34] : memref<1x16x1x16x4xf32, #tpu.memory_space<vmem>>, vector<1x16x1x16x4xf32>
    %34 = vector.shape_cast %33 : vector<1x16x1x16x4xf32> to vector<16x1x16x4xf32>
    %35 = vector.shape_cast %32 : vector<16x1x16x4xf32> to vector<1x16x1x16x4xf32>
    tpu.vector_store %arg5[%c0_30, %c0_31, %c0_32, %c0_33, %c0_34], %35 {strides = array<i32>} : memref<1x16x1x16x4xf32, #tpu.memory_space<vmem>>, vector<1x16x1x16x4xf32>,
    return
  }
  func.func @transform_0(%arg0: i32, %arg1: i32) -> (i32, i32, i32, i32) {
    %c0_i32 = arith.constant 0 : i32
    %c0_i32_0 = arith.constant 0 : i32
    %c0_i32_1 = arith.constant 0 : i32
    %c0_i32_2 = arith.constant 0 : i32
    return %arg0, %c0_i32, %c0_i32_0, %c0_i32_1 : i32, i32, i32, i32
  }
  func.func @transform_1(%arg0: i32, %arg1: i32) -> (i32, i32, i32) {
    %c0_i32 = arith.constant 0 : i32
    %c0_i32_0 = arith.constant 0 : i32
    %c0_i32_1 = arith.constant 0 : i32
    return %arg1, %c0_i32, %c0_i32_0 : i32, i32, i32
  }
  func.func @transform_2(%arg0: i32, %arg1: i32) -> (i32, i32, i32) {
    %c0_i32 = arith.constant 0 : i32
    %c0_i32_0 = arith.constant 0 : i32
    %c0_i32_1 = arith.constant 0 : i32
    %c0_i32_2 = arith.constant 0 : i32
    return %c0_i32, %c0_i32_0, %c0_i32_1 : i32, i32, i32
  }
  func.func @transform_3(%arg0: i32, %arg1: i32) -> (i32, i32, i32, i32, i32) {
    %c0_i32 = arith.constant 0 : i32
    %c0_i32_0 = arith.constant 0 : i32
    %c0_i32_1 = arith.constant 0 : i32
    %c0_i32_2 = arith.constant 0 : i32
    return %arg0, %c0_i32, %arg1, %c0_i32_0, %c0_i32_1 : i32, i32, i32, i32, i32
  }
}

</mosaic_0001>

<llo_original>
// kernel: tpu_custom_call.1
$region0: #{tpu_custom_call.1}
  #allocation0 [shape = 'u32[]', space=smem, size = 0x4, offset = 0x4, fixed_abs, tag = 'smem constant byte address 0x4 - core index']
  #allocation1 [shape = 'u32[144,128]{1,0:T(1,128)}', space=vmem, size = 0x12000, scoped, tag = 'internal scratch']
  #allocation2 [shape = 'bf16[18,18,4]{2,1,0:T(8,128)(2,1)}', space=vmem, size = 0x1b000, scoped, tag = 'scratch operand']
  %s0 = inlined_call_operand.vmem [shape: bf16[2,16,16,4], index: 0, kind: input, shape index: {}]
  %s1 = inlined_call_operand.vmem [shape: bf16[2,24,4], index: 1, kind: input, shape index: {}]
  %s2 = inlined_call_operand.vmem [shape: f32[1,1,4], index: 2, kind: input, shape index: {}]
  %s3 = inlined_call_operand.vmem [shape: f32[2,16,2,16,4], index: 3, kind: output, shape index: {}]
  %s4 = sld [smem:[#allocation0]]
  $region79: #{tpu_custom_call.1} parent=0
    _
  %s6 = ssub.s32 1, %s4
  %s7 = scalar_select 0, %s6, %s4
  $region1: #{tpu_custom_call.1} parent=0
    #allocation3 [shape = 'u8[262144]{0}', space=vmem, size = 0x40000, scoped, tag = 'output window, operand 0']
    loop: start=0, step=1, limit=6
    $region2: #{tpu_custom_call.1} parent=1 // loop_pre_header
      _
    $region3: #{tpu_custom_call.1} parent=1 // loop_header
      %s9 = sphi 0, %s13
      %p10 = scmp.ge.s32.totalorder %s9, 6
      %s16 = sphi 0, %s28
      %s17 = sphi 0, %s24
      %s18 = sphi 0, %s16
      %s19 = sphi 0, %s17
      %s20 = sphi 0, %s18
      %s21 = sphi 0, %s19
      %s31 = sphi 0, %s33
      %s34 = sphi 0, %s31
      %s35 = sphi 0, %s34
      %s51 = sphi 0, %s35
      %s57 = sphi 0, %s59
      %s60 = sphi 0, %s57
      %s61 = sphi 0, %s60
      %s77 = sphi 0, %s61
      %s81 = sphi 0, %s81
      %s83 = sphi 0, %s81
      %s84 = sphi 0, %s83
      %s98 = sphi 0, %s84
      %s106 = sphi 0, %s108
      %s109 = sphi 0, %s106
      %s110 = sphi 0, %s109
      %s126 = sphi 0, %s110
    $region4: #{tpu_custom_call.1} parent=1 // loop_header_branch
      %12 = sbr.rel (%p10) target = $region8
    $region5: #{tpu_custom_call.1} parent=1 // loop_body
      %s14 = ssub.s32 %s9, 1
      %s15 = ssub.s32 %s9, 2
      %s22 = sadd.s32 1, %s17
      %p23 = scmp.ge.s32.totalorder %s22, 2
      %s24 = scalar_select %p23, 0, %s22
      %s25 = sadd.s32 1, %s16
      %s26 = scalar_select %p23, %s25, %s16
      %p27 = scmp.ge.s32.totalorder %s26, 2
      %s28 = scalar_select %p27, 0, %s26
      %s29 = ssub.s32 %s16, %s28
      %p30 = scmp.eq.s32.totalorder %s29, 0
      %s32 = sadd.s32 %s31, 1
      %s33 = scalar_select %p30, %s31, %s32
      %p36 = pneg %p30
      %p37 = scmp.eq.s32.totalorder %s9, 3
      %p38 = por %p36, %p37
      %p39 = scmp.ne.s32.totalorder %s31, %s34
      %p40 = scmp.eq.s32.totalorder %s9, 0
      %p41 = por %p39, %p40
      %p42 = scmp.ne.s32.totalorder %s31, %s34
      %p43 = scmp.eq.s32.totalorder %s14, 3
      %p44 = por %p42, %p43
      %p45 = scmp.ne.s32.totalorder %s34, %s35
      %p46 = scmp.eq.s32.totalorder %s14, 0
      %p47 = por %p45, %p46
      %p48 = scmp.ne.s32.totalorder %s34, %s35
      %p49 = scmp.eq.s32.totalorder %s15, 3
      %p50 = por %p48, %p49
      %p52 = scmp.ne.s32.totalorder %s35, %s51
      %p53 = scmp.eq.s32.totalorder %s15, 0
      %p54 = por %p52, %p53
      %s55 = ssub.s32 %s17, %s24
      %p56 = scmp.eq.s32.totalorder %s55, 0
      %s58 = sadd.s32 %s57, 1
      %s59 = scalar_select %p56, %s57, %s58
      %p62 = pneg %p56
      %p63 = scmp.eq.s32.totalorder %s9, 3
      %p64 = por %p62, %p63
      %p65 = scmp.ne.s32.totalorder %s57, %s60
      %p66 = scmp.eq.s32.totalorder %s9, 0
      %p67 = por %p65, %p66
      %p68 = scmp.ne.s32.totalorder %s57, %s60
      %p69 = scmp.eq.s32.totalorder %s14, 3
      %p70 = por %p68, %p69
      %p71 = scmp.ne.s32.totalorder %s60, %s61
      %p72 = scmp.eq.s32.totalorder %s14, 0
      %p73 = por %p71, %p72
      %p74 = scmp.ne.s32.totalorder %s60, %s61
      %p75 = scmp.eq.s32.totalorder %s15, 3
      %p76 = por %p74, %p75
      %p78 = scmp.ne.s32.totalorder %s61, %s77
      %p79 = scmp.eq.s32.totalorder %s15, 0
      %p80 = por %p78, %p79
      %s82 = sadd.s32 %s81, 1
      %p85 = scmp.eq.s32.totalorder %s9, 3
      %p86 = scmp.ne.s32.totalorder %s81, %s83
      %p87 = scmp.eq.s32.totalorder %s9, 0
      %p88 = por %p86, %p87
      %p89 = scmp.ne.s32.totalorder %s81, %s83
      %p90 = scmp.eq.s32.totalorder %s14, 3
      %p91 = por %p89, %p90
      %p92 = scmp.ne.s32.totalorder %s83, %s84
      %p93 = scmp.eq.s32.totalorder %s14, 0
      %p94 = por %p92, %p93
      %p95 = scmp.ne.s32.totalorder %s83, %s84
      %p96 = scmp.eq.s32.totalorder %s15, 3
      %p97 = por %p95, %p96
      %p99 = scmp.ne.s32.totalorder %s84, %s98
      %p100 = scmp.eq.s32.totalorder %s15, 0
      %p101 = por %p99, %p100
      %s102 = ssub.s32 %s16, %s28
      %s103 = ssub.s32 %s17, %s24
      %s104 = sor.u32 %s102, %s103
      %p105 = scmp.eq.s32.totalorder %s104, 0
      %s107 = sadd.s32 %s106, 1
      %s108 = scalar_select %p105, %s106, %s107
      %p111 = pneg %p105
      %p112 = scmp.eq.s32.totalorder %s9, 3
      %p113 = por %p111, %p112
      %p114 = scmp.ne.s32.totalorder %s106, %s109
      %p115 = scmp.eq.s32.totalorder %s9, 0
      %p116 = por %p114, %p115
      %p117 = scmp.ne.s32.totalorder %s106, %s109
      %p118 = scmp.eq.s32.totalorder %s14, 3
      %p119 = por %p117, %p118
      %p120 = scmp.ne.s32.totalorder %s109, %s110
      %p121 = scmp.eq.s32.totalorder %s14, 0
      %p122 = por %p120, %p121
      %p123 = scmp.ne.s32.totalorder %s109, %s110
      %p124 = scmp.eq.s32.totalorder %s15, 3
      %p125 = por %p123, %p124
      %p127 = scmp.ne.s32.totalorder %s110, %s126
      %p128 = scmp.eq.s32.totalorder %s15, 0
      %p129 = por %p127, %p128
      %p130 = scmp.le.s32.totalorder 1, %s9
      %p131 = scmp.lt.s32.totalorder %s9, 5
      %p132 = pnand %p130, %p131
      %p133 = pneg %p132
      // Predicated region
      $region9: #{tpu_custom_call.1} parent=5 // pred_check
        _
      $region10: #{tpu_custom_call.1} parent=5 // pred_check_branch
        %135 = sbr.rel (%p132) target = $region12
      $region11: #{tpu_custom_call.1} parent=5 // pred_region
        %s136 = ssub.s32 %s9, 1
        // Predicated region
        $region13: #{tpu_custom_call.1} parent=11 // pred_check
          %p137 = pneg %p94
        $region14: #{tpu_custom_call.1} parent=11 // pred_check_branch
          %139 = sbr.rel (%p137) target = $region16
        $region15: #{tpu_custom_call.1} parent=11 // pred_region
          _
        $region16: #{tpu_custom_call.1} parent=11 // pred_fallthru
          _
      $region12: #{tpu_custom_call.1} parent=5 // pred_fallthru
        _
      %p140 = scmp.lt.s32.totalorder %s9, 4
      // Predicated region
      $region17: #{tpu_custom_call.1} parent=5 // pred_check
        %p141 = pneg %p140
      $region18: #{tpu_custom_call.1} parent=5 // pred_check_branch
        %143 = sbr.rel (%p141) target = $region20
      $region19: #{tpu_custom_call.1} parent=5 // pred_region
        // Predicated region
        $region21: #{tpu_custom_call.1} parent=19 // pred_check
          %p144 = pneg %p41
        $region22: #{tpu_custom_call.1} parent=19 // pred_check_branch
          %146 = sbr.rel (%p144) target = $region24
        $region23: #{tpu_custom_call.1} parent=19 // pred_region
          %p147 = scmp.lt.s32.totalorder %s16, 1
          %s148 = scalar_select %p147, %s16, 1
          %s149 = smul.addr %s148, 32
          %s150 = smul.addr %s149, 4
          %s151 = scalar_lea.vmem %s0, %s150
        $region24: #{tpu_custom_call.1} parent=19 // pred_fallthru
          _
        // Predicated region
        $region25: #{tpu_custom_call.1} parent=19 // pred_check
          %p152 = pneg %p67
        $region26: #{tpu_custom_call.1} parent=19 // pred_check_branch
          %154 = sbr.rel (%p152) target = $region28
        $region27: #{tpu_custom_call.1} parent=19 // pred_region
          %p155 = scmp.lt.s32.totalorder %s17, 1
          %s156 = scalar_select %p155, %s17, 1
          %s157 = smul.addr %s156, 3
          %s158 = smul.addr %s157, 4
          %s159 = scalar_lea.vmem %s1, %s158
        $region28: #{tpu_custom_call.1} parent=19 // pred_fallthru
          _
      $region20: #{tpu_custom_call.1} parent=5 // pred_fallthru
        _
      %p160 = scmp.le.s32.totalorder 1, %s9
      %p161 = scmp.lt.s32.totalorder %s9, 5
      %p162 = pnand %p160, %p161
      %p163 = pneg %p162
      // Predicated region
      $region29: #{tpu_custom_call.1} parent=5 // pred_check
        _
      $region30: #{tpu_custom_call.1} parent=5 // pred_check_branch
        %165 = sbr.rel (%p162) target = $region32
      $region31: #{tpu_custom_call.1} parent=5 // pred_region
        %s166 = ssub.s32 %s9, 1
        %p167 = scmp.lt.s32.totalorder %s18, 1
        %s168 = scalar_select %p167, %s18, 1
        %s169 = smul.addr %s168, 32
        %s170 = smul.addr %s169, 4
        %s171 = scalar_lea.vmem %s0, %s170
        %p172 = pneg %p47
        %p173 = pneg %p44
        %p174 = scmp.lt.s32.totalorder %s19, 1
        %s175 = scalar_select %p174, %s19, 1
        %s176 = smul.addr %s175, 3
        %s177 = smul.addr %s176, 4
        %s178 = scalar_lea.vmem %s1, %s177
        %p179 = pneg %p73
        %p180 = pneg %p70
        %p181 = pneg %p94
        %p182 = pneg %p91
        %p183 = pneg %p122
        %p184 = pneg %p119
        %s185 = sand.u32 %s109, 1
        %s186 = sand.u32 %s109, 1
        %s187 = smul.addr %s186, 256
        %s188 = scalar_lea.vmem [#allocation3], %s187
        %p189 = scmp.lt.s32.totalorder %s18, 1
        %s190 = scalar_select %p189, %s18, 1
        %s191 = smul.addr %s190, 32
        %s192 = smul.addr %s191, 4
        %s193 = scalar_lea.vmem %s0, %s192
        %p194 = scmp.lt.s32.totalorder %s19, 1
        %s195 = scalar_select %p194, %s19, 1
        %s196 = smul.addr %s195, 3
        %s197 = smul.addr %s196, 4
        %s198 = scalar_lea.vmem %s1, %s197
        %vm200 = vcmask 27648
        %201 = vst.msk [vmem:[#allocation2] sm:$0xf] %vm200, 0
        %202 = vst.msk [vmem:[#allocation2 + $0x4] sm:$0xf] %vm200, 0
        %vm203 = vcmask 24576
        %204 = vst.msk [vmem:[#allocation2 + $0x8] sm:$0x1] %vm203, 0
        %205 = vst.msk [vmem:[#allocation2 + $0xc] sm:$0xf] %vm200, 0
        %206 = vst.msk [vmem:[#allocation2 + $0x10] sm:$0xf] %vm200, 0
        %207 = vst.msk [vmem:[#allocation2 + $0x14] sm:$0x1] %vm203, 0
        %208 = vst.msk [vmem:[#allocation2 + $0x18] sm:$0xf] %vm200, 0
        %209 = vst.msk [vmem:[#allocation2 + $0x1c] sm:$0xf] %vm200, 0
        %210 = vst.msk [vmem:[#allocation2 + $0x20] sm:$0x1] %vm203, 0
        %211 = vst.msk [vmem:[#allocation2 + $0x24] sm:$0xf] %vm200, 0
        %212 = vst.msk [vmem:[#allocation2 + $0x28] sm:$0xf] %vm200, 0
        %213 = vst.msk [vmem:[#allocation2 + $0x2c] sm:$0x1] %vm203, 0
        %214 = vst.msk [vmem:[#allocation2 + $0x30] sm:$0xf] %vm200, 0
        %215 = vst.msk [vmem:[#allocation2 + $0x34] sm:$0xf] %vm200, 0
        %216 = vst.msk [vmem:[#allocation2 + $0x38] sm:$0x1] %vm203, 0
        %217 = vst.msk [vmem:[#allocation2 + $0x3c] sm:$0xf] %vm200, 0
        %218 = vst.msk [vmem:[#allocation2 + $0x40] sm:$0xf] %vm200, 0
        %219 = vst.msk [vmem:[#allocation2 + $0x44] sm:$0x1] %vm203, 0
        %220 = vst.msk [vmem:[#allocation2 + $0x48] sm:$0xf] %vm200, 0
        %221 = vst.msk [vmem:[#allocation2 + $0x4c] sm:$0xf] %vm200, 0
        %222 = vst.msk [vmem:[#allocation2 + $0x50] sm:$0x1] %vm203, 0
        %223 = vst.msk [vmem:[#allocation2 + $0x54] sm:$0xf] %vm200, 0
        %224 = vst.msk [vmem:[#allocation2 + $0x58] sm:$0xf] %vm200, 0
        %225 = vst.msk [vmem:[#allocation2 + $0x5c] sm:$0x1] %vm203, 0
        %226 = vst.msk [vmem:[#allocation2 + $0x60] sm:$0xf] %vm200, 0
        %227 = vst.msk [vmem:[#allocation2 + $0x64] sm:$0xf] %vm200, 0
        %228 = vst.msk [vmem:[#allocation2 + $0x68] sm:$0x1] %vm203, 0
        %229 = vst.msk [vmem:[#allocation2 + $0x6c] sm:$0xf] %vm200, 0
        %230 = vst.msk [vmem:[#allocation2 + $0x70] sm:$0xf] %vm200, 0
        %231 = vst.msk [vmem:[#allocation2 + $0x74] sm:$0x1] %vm203, 0
        %232 = vst.msk [vmem:[#allocation2 + $0x78] sm:$0xf] %vm200, 0
        %233 = vst.msk [vmem:[#allocation2 + $0x7c] sm:$0xf] %vm200, 0
        %234 = vst.msk [vmem:[#allocation2 + $0x80] sm:$0x1] %vm203, 0
        %235 = vst.msk [vmem:[#allocation2 + $0x84] sm:$0xf] %vm200, 0
        %236 = vst.msk [vmem:[#allocation2 + $0x88] sm:$0xf] %vm200, 0
        %237 = vst.msk [vmem:[#allocation2 + $0x8c] sm:$0x1] %vm203, 0
        %238 = vst.msk [vmem:[#allocation2 + $0x90] sm:$0xf] %vm200, 0
        %239 = vst.msk [vmem:[#allocation2 + $0x94] sm:$0xf] %vm200, 0
        %240 = vst.msk [vmem:[#allocation2 + $0x98] sm:$0x1] %vm203, 0
        %241 = vst.msk [vmem:[#allocation2 + $0x9c] sm:$0xf] %vm200, 0
        %242 = vst.msk [vmem:[#allocation2 + $0xa0] sm:$0xf] %vm200, 0
        %243 = vst.msk [vmem:[#allocation2 + $0xa4] sm:$0x1] %vm203, 0
        %244 = vst.msk [vmem:[#allocation2 + $0xa8] sm:$0xf] %vm200, 0
        %245 = vst.msk [vmem:[#allocation2 + $0xac] sm:$0xf] %vm200, 0
        %246 = vst.msk [vmem:[#allocation2 + $0xb0] sm:$0x1] %vm203, 0
        %247 = vst.msk [vmem:[#allocation2 + $0xb4] sm:$0xf] %vm200, 0
        %248 = vst.msk [vmem:[#allocation2 + $0xb8] sm:$0xf] %vm200, 0
        %249 = vst.msk [vmem:[#allocation2 + $0xbc] sm:$0x1] %vm203, 0
        %250 = vst.msk [vmem:[#allocation2 + $0xc0] sm:$0xf] %vm200, 0
        %251 = vst.msk [vmem:[#allocation2 + $0xc4] sm:$0xf] %vm200, 0
        %252 = vst.msk [vmem:[#allocation2 + $0xc8] sm:$0x1] %vm203, 0
        %253 = vst.msk [vmem:[#allocation2 + $0xcc] sm:$0xf] %vm200, 0
        %254 = vst.msk [vmem:[#allocation2 + $0xd0] sm:$0xf] %vm200, 0
        %255 = vst.msk [vmem:[#allocation2 + $0xd4] sm:$0x1] %vm203, 0
        %v256 = vld [vmem:[%s193] sm:$0xf]
        %v257 = vld [vmem:[%s193 + $0x4] sm:$0xf]
        %v258 = vld [vmem:[%s193 + $0x8] sm:$0xf]
        %v259 = vld [vmem:[%s193 + $0xc] sm:$0xf]
        %v260 = vld [vmem:[%s193 + $0x10] sm:$0xf]
        %v261 = vld [vmem:[%s193 + $0x14] sm:$0xf]
        %v262 = vld [vmem:[%s193 + $0x18] sm:$0xf]
        %v263 = vld [vmem:[%s193 + $0x1c] sm:$0xf]
        %v264 = vld [vmem:[%s193 + $0x20] sm:$0xf]
        %v265 = vld [vmem:[%s193 + $0x24] sm:$0xf]
        %v266 = vld [vmem:[%s193 + $0x28] sm:$0xf]
        %v267 = vld [vmem:[%s193 + $0x2c] sm:$0xf]
        %v268 = vld [vmem:[%s193 + $0x30] sm:$0xf]
        %v269 = vld [vmem:[%s193 + $0x34] sm:$0xf]
        %v270 = vld [vmem:[%s193 + $0x38] sm:$0xf]
        %v271 = vld [vmem:[%s193 + $0x3c] sm:$0xf]
        %v272 = vld [vmem:[%s193 + $0x40] sm:$0xf]
        %v273 = vld [vmem:[%s193 + $0x44] sm:$0xf]
        %v274 = vld [vmem:[%s193 + $0x48] sm:$0xf]
        %v275 = vld [vmem:[%s193 + $0x4c] sm:$0xf]
        %v276 = vld [vmem:[%s193 + $0x50] sm:$0xf]
        %v277 = vld [vmem:[%s193 + $0x54] sm:$0xf]
        %v278 = vld [vmem:[%s193 + $0x58] sm:$0xf]
        %v279 = vld [vmem:[%s193 + $0x5c] sm:$0xf]
        %v280 = vld [vmem:[%s193 + $0x60] sm:$0xf]
        %v281 = vld [vmem:[%s193 + $0x64] sm:$0xf]
        %v282 = vld [vmem:[%s193 + $0x68] sm:$0xf]
        %v283 = vld [vmem:[%s193 + $0x6c] sm:$0xf]
        %v284 = vld [vmem:[%s193 + $0x70] sm:$0xf]
        %v285 = vld [vmem:[%s193 + $0x74] sm:$0xf]
        %v286 = vld [vmem:[%s193 + $0x78] sm:$0xf]
        %v287 = vld [vmem:[%s193 + $0x7c] sm:$0xf]
        %vm288 = vsmask.f32 256
        %vm289 = vsmask.f32 4368
        %vm290 = vmor %vm288, %vm289
        %v292 = vshrl.u32 %v256, 16
        %v294 = vrot.slane %v292, 7
        %v295 = vshll.u32 %v256, 16
        %v297 = vor.u32 %v294, %v295
        %v298 = vrot.slane %v294, 4
        %v300 = vshrl.u32 %v257, 16
        %v302 = vrot.slane %v300, 7
        %v303 = vshll.u32 %v257, 16
        %v305 = vor.u32 %v302, %v303
        %v306 = vsel %vm290, %v298, %v305
        %v307 = vrot.slane %v302, 4
        %v309 = vshrl.u32 %v258, 16
        %v311 = vrot.slane %v309, 7
        %v312 = vshll.u32 %v258, 16
        %v314 = vor.u32 %v311, %v312
        %v315 = vrot.slane %v311, 4
        %v317 = vshrl.u32 %v259, 16
        %v319 = vrot.slane %v317, 7
        %v320 = vshll.u32 %v259, 16
        %v322 = vor.u32 %v319, %v320
        %v323 = vsel %vm290, %v315, %v322
        %v324 = vrot.slane %v319, 4
        %v326 = vshrl.u32 %v260, 16
        %v328 = vrot.slane %v326, 7
        %v329 = vshll.u32 %v260, 16
        %v331 = vor.u32 %v328, %v329
        %v332 = vrot.slane %v328, 4
        %v334 = vshrl.u32 %v261, 16
        %v336 = vrot.slane %v334, 7
        %v337 = vshll.u32 %v261, 16
        %v339 = vor.u32 %v336, %v337
        %v340 = vsel %vm290, %v332, %v339
        %v341 = vrot.slane %v336, 4
        %v343 = vshrl.u32 %v262, 16
        %v345 = vrot.slane %v343, 7
        %v346 = vshll.u32 %v262, 16
        %v348 = vor.u32 %v345, %v346
        %v349 = vrot.slane %v345, 4
        %v351 = vshrl.u32 %v263, 16
        %v353 = vrot.slane %v351, 7
        %v354 = vshll.u32 %v263, 16
        %v356 = vor.u32 %v353, %v354
        %v357 = vsel %vm290, %v349, %v356
        %v358 = vrot.slane %v353, 4
        %v360 = vshrl.u32 %v264, 16
        %v362 = vrot.slane %v360, 7
        %v363 = vshll.u32 %v264, 16
        %v365 = vor.u32 %v362, %v363
        %v366 = vrot.slane %v362, 4
        %v368 = vshrl.u32 %v265, 16
        %v370 = vrot.slane %v368, 7
        %v371 = vshll.u32 %v265, 16
        %v373 = vor.u32 %v370, %v371
        %v374 = vsel %vm290, %v366, %v373
        %v375 = vrot.slane %v370, 4
        %v377 = vshrl.u32 %v266, 16
        %v379 = vrot.slane %v377, 7
        %v380 = vshll.u32 %v266, 16
        %v382 = vor.u32 %v379, %v380
        %v383 = vrot.slane %v379, 4
        %v385 = vshrl.u32 %v267, 16
        %v387 = vrot.slane %v385, 7
        %v388 = vshll.u32 %v267, 16
        %v390 = vor.u32 %v387, %v388
        %v391 = vsel %vm290, %v383, %v390
        %v392 = vrot.slane %v387, 4
        %v394 = vshrl.u32 %v268, 16
        %v396 = vrot.slane %v394, 7
        %v397 = vshll.u32 %v268, 16
        %v399 = vor.u32 %v396, %v397
        %v400 = vrot.slane %v396, 4
        %v402 = vshrl.u32 %v269, 16
        %v404 = vrot.slane %v402, 7
        %v405 = vshll.u32 %v269, 16
        %v407 = vor.u32 %v404, %v405
        %v408 = vsel %vm290, %v400, %v407
        %v409 = vrot.slane %v404, 4
        %v411 = vshrl.u32 %v270, 16
        %v413 = vrot.slane %v411, 7
        %v414 = vshll.u32 %v270, 16
        %v416 = vor.u32 %v413, %v414
        %v417 = vrot.slane %v413, 4
        %v419 = vshrl.u32 %v271, 16
        %v421 = vrot.slane %v419, 7
        %v422 = vshll.u32 %v271, 16
        %v424 = vor.u32 %v421, %v422
        %v425 = vsel %vm290, %v417, %v424
        %v426 = vrot.slane %v421, 4
        %v428 = vshrl.u32 %v272, 16
        %v430 = vrot.slane %v428, 7
        %v431 = vshll.u32 %v272, 16
        %v433 = vor.u32 %v430, %v431
        %v434 = vrot.slane %v430, 4
        %v436 = vshrl.u32 %v273, 16
        %v438 = vrot.slane %v436, 7
        %v439 = vshll.u32 %v273, 16
        %v441 = vor.u32 %v438, %v439
        %v442 = vsel %vm290, %v434, %v441
        %v443 = vrot.slane %v438, 4
        %v445 = vshrl.u32 %v274, 16
        %v447 = vrot.slane %v445, 7
        %v448 = vshll.u32 %v274, 16
        %v450 = vor.u32 %v447, %v448
        %v451 = vrot.slane %v447, 4
        %v453 = vshrl.u32 %v275, 16
        %v455 = vrot.slane %v453, 7
        %v456 = vshll.u32 %v275, 16
        %v458 = vor.u32 %v455, %v456
        %v459 = vsel %vm290, %v451, %v458
        %v460 = vrot.slane %v455, 4
        %v462 = vshrl.u32 %v276, 16
        %v464 = vrot.slane %v462, 7
        %v465 = vshll.u32 %v276, 16
        %v467 = vor.u32 %v464, %v465
        %v468 = vrot.slane %v464, 4
        %v470 = vshrl.u32 %v277, 16
        %v472 = vrot.slane %v470, 7
        %v473 = vshll.u32 %v277, 16
        %v475 = vor.u32 %v472, %v473
        %v476 = vsel %vm290, %v468, %v475
        %v477 = vrot.slane %v472, 4
        %v479 = vshrl.u32 %v278, 16
        %v481 = vrot.slane %v479, 7
        %v482 = vshll.u32 %v278, 16
        %v484 = vor.u32 %v481, %v482
        %v485 = vrot.slane %v481, 4
        %v487 = vshrl.u32 %v279, 16
        %v489 = vrot.slane %v487, 7
        %v490 = vshll.u32 %v279, 16
        %v492 = vor.u32 %v489, %v490
        %v493 = vsel %vm290, %v485, %v492
        %v494 = vrot.slane %v489, 4
        %v496 = vshrl.u32 %v280, 16
        %v498 = vrot.slane %v496, 7
        %v499 = vshll.u32 %v280, 16
        %v501 = vor.u32 %v498, %v499
        %v502 = vrot.slane %v498, 4
        %v504 = vshrl.u32 %v281, 16
        %v506 = vrot.slane %v504, 7
        %v507 = vshll.u32 %v281, 16
        %v509 = vor.u32 %v506, %v507
        %v510 = vsel %vm290, %v502, %v509
        %v511 = vrot.slane %v506, 4
        %v513 = vshrl.u32 %v282, 16
        %v515 = vrot.slane %v513, 7
        %v516 = vshll.u32 %v282, 16
        %v518 = vor.u32 %v515, %v516
        %v519 = vrot.slane %v515, 4
        %v521 = vshrl.u32 %v283, 16
        %v523 = vrot.slane %v521, 7
        %v524 = vshll.u32 %v283, 16
        %v526 = vor.u32 %v523, %v524
        %v527 = vsel %vm290, %v519, %v526
        %v528 = vrot.slane %v523, 4
        %v530 = vshrl.u32 %v284, 16
        %v532 = vrot.slane %v530, 7
        %v533 = vshll.u32 %v284, 16
        %v535 = vor.u32 %v532, %v533
        %v536 = vrot.slane %v532, 4
        %v538 = vshrl.u32 %v285, 16
        %v540 = vrot.slane %v538, 7
        %v541 = vshll.u32 %v285, 16
        %v543 = vor.u32 %v540, %v541
        %v544 = vsel %vm290, %v536, %v543
        %v545 = vrot.slane %v540, 4
        %v547 = vshrl.u32 %v286, 16
        %v549 = vrot.slane %v547, 7
        %v550 = vshll.u32 %v286, 16
        %v552 = vor.u32 %v549, %v550
        %v553 = vrot.slane %v549, 4
        %v555 = vshrl.u32 %v287, 16
        %v557 = vrot.slane %v555, 7
        %v558 = vshll.u32 %v287, 16
        %v560 = vor.u32 %v557, %v558
        %v561 = vsel %vm290, %v553, %v560
        %v562 = vrot.slane %v557, 4
        %s611 = scalar_lea.vmem [#allocation2], 12
        %vm612 = vcmask 27648
        %vm613 = vsmask.f32 7938
        %vm614 = vmand %vm612, %vm613
        %v615 = vld [vmem:[%s611] sm:$0xf]
        %v616 = vsel %vm614, %v297, %v615
        %617 = vst [vmem:[%s611] sm:$0xf] %v616
        %618 = vst.msk [vmem:[%s611 + $0x4] sm:$0xf] %vm200, %v306
        %vm619 = vcmask 24576
        %vm620 = vmand %vm619, %vm288
        %v621 = vld [vmem:[%s611 + $0x8] sm:$0x1]
        %v622 = vsel %vm620, %v307, %v621
        %623 = vst [vmem:[%s611 + $0x8] sm:$0x1] %v622
        %v624 = vld [vmem:[%s611 + $0xc] sm:$0xf]
        %v625 = vsel %vm614, %v314, %v624
        %626 = vst [vmem:[%s611 + $0xc] sm:$0xf] %v625
        %627 = vst.msk [vmem:[%s611 + $0x10] sm:$0xf] %vm200, %v323
        %v628 = vld [vmem:[%s611 + $0x14] sm:$0x1]
        %v629 = vsel %vm620, %v324, %v628
        %630 = vst [vmem:[%s611 + $0x14] sm:$0x1] %v629
        %v631 = vld [vmem:[%s611 + $0x18] sm:$0xf]
        %v632 = vsel %vm614, %v331, %v631
        %633 = vst [vmem:[%s611 + $0x18] sm:$0xf] %v632
        %634 = vst.msk [vmem:[%s611 + $0x1c] sm:$0xf] %vm200, %v340
        %v635 = vld [vmem:[%s611 + $0x20] sm:$0x1]
        %v636 = vsel %vm620, %v341, %v635
        %637 = vst [vmem:[%s611 + $0x20] sm:$0x1] %v636
        %v638 = vld [vmem:[%s611 + $0x24] sm:$0xf]
        %v639 = vsel %vm614, %v348, %v638
        %640 = vst [vmem:[%s611 + $0x24] sm:$0xf] %v639
        %641 = vst.msk [vmem:[%s611 + $0x28] sm:$0xf] %vm200, %v357
        %v642 = vld [vmem:[%s611 + $0x2c] sm:$0x1]
        %v643 = vsel %vm620, %v358, %v642
        %644 = vst [vmem:[%s611 + $0x2c] sm:$0x1] %v643
        %v645 = vld [vmem:[%s611 + $0x30] sm:$0xf]
        %v646 = vsel %vm614, %v365, %v645
        %647 = vst [vmem:[%s611 + $0x30] sm:$0xf] %v646
        %648 = vst.msk [vmem:[%s611 + $0x34] sm:$0xf] %vm200, %v374
        %v649 = vld [vmem:[%s611 + $0x38] sm:$0x1]
        %v650 = vsel %vm620, %v375, %v649
        %651 = vst [vmem:[%s611 + $0x38] sm:$0x1] %v650
        %v652 = vld [vmem:[%s611 + $0x3c] sm:$0xf]
        %v653 = vsel %vm614, %v382, %v652
        %654 = vst [vmem:[%s611 + $0x3c] sm:$0xf] %v653
        %655 = vst.msk [vmem:[%s611 + $0x40] sm:$0xf] %vm200, %v391
        %v656 = vld [vmem:[%s611 + $0x44] sm:$0x1]
        %v657 = vsel %vm620, %v392, %v656
        %658 = vst [vmem:[%s611 + $0x44] sm:$0x1] %v657
        %v659 = vld [vmem:[%s611 + $0x48] sm:$0xf]
        %v660 = vsel %vm614, %v399, %v659
        %661 = vst [vmem:[%s611 + $0x48] sm:$0xf] %v660
        %662 = vst.msk [vmem:[%s611 + $0x4c] sm:$0xf] %vm200, %v408
        %v663 = vld [vmem:[%s611 + $0x50] sm:$0x1]
        %v664 = vsel %vm620, %v409, %v663
        %665 = vst [vmem:[%s611 + $0x50] sm:$0x1] %v664
        %v666 = vld [vmem:[%s611 + $0x54] sm:$0xf]
        %v667 = vsel %vm614, %v416, %v666
        %668 = vst [vmem:[%s611 + $0x54] sm:$0xf] %v667
        %669 = vst.msk [vmem:[%s611 + $0x58] sm:$0xf] %vm200, %v425
        %v670 = vld [vmem:[%s611 + $0x5c] sm:$0x1]
        %v671 = vsel %vm620, %v426, %v670
        %672 = vst [vmem:[%s611 + $0x5c] sm:$0x1] %v671
        %v673 = vld [vmem:[%s611 + $0x60] sm:$0xf]
        %v674 = vsel %vm614, %v433, %v673
        %675 = vst [vmem:[%s611 + $0x60] sm:$0xf] %v674
        %676 = vst.msk [vmem:[%s611 + $0x64] sm:$0xf] %vm200, %v442
        %v677 = vld [vmem:[%s611 + $0x68] sm:$0x1]
        %v678 = vsel %vm620, %v443, %v677
        %679 = vst [vmem:[%s611 + $0x68] sm:$0x1] %v678
        %v680 = vld [vmem:[%s611 + $0x6c] sm:$0xf]
        %v681 = vsel %vm614, %v450, %v680
        %682 = vst [vmem:[%s611 + $0x6c] sm:$0xf] %v681
        %683 = vst.msk [vmem:[%s611 + $0x70] sm:$0xf] %vm200, %v459
        %v684 = vld [vmem:[%s611 + $0x74] sm:$0x1]
        %v685 = vsel %vm620, %v460, %v684
        %686 = vst [vmem:[%s611 + $0x74] sm:$0x1] %v685
        %v687 = vld [vmem:[%s611 + $0x78] sm:$0xf]
        %v688 = vsel %vm614, %v467, %v687
        %689 = vst [vmem:[%s611 + $0x78] sm:$0xf] %v688
        %690 = vst.msk [vmem:[%s611 + $0x7c] sm:$0xf] %vm200, %v476
        %v691 = vld [vmem:[%s611 + $0x80] sm:$0x1]
        %v692 = vsel %vm620, %v477, %v691
        %693 = vst [vmem:[%s611 + $0x80] sm:$0x1] %v692
        %v694 = vld [vmem:[%s611 + $0x84] sm:$0xf]
        %v695 = vsel %vm614, %v484, %v694
        %696 = vst [vmem:[%s611 + $0x84] sm:$0xf] %v695
        %697 = vst.msk [vmem:[%s611 + $0x88] sm:$0xf] %vm200, %v493
        %v698 = vld [vmem:[%s611 + $0x8c] sm:$0x1]
        %v699 = vsel %vm620, %v494, %v698
        %700 = vst [vmem:[%s611 + $0x8c] sm:$0x1] %v699
        %v701 = vld [vmem:[%s611 + $0x90] sm:$0xf]
        %v702 = vsel %vm614, %v501, %v701
        %703 = vst [vmem:[%s611 + $0x90] sm:$0xf] %v702
        %704 = vst.msk [vmem:[%s611 + $0x94] sm:$0xf] %vm200, %v510
        %v705 = vld [vmem:[%s611 + $0x98] sm:$0x1]
        %v706 = vsel %vm620, %v511, %v705
        %707 = vst [vmem:[%s611 + $0x98] sm:$0x1] %v706
        %v708 = vld [vmem:[%s611 + $0x9c] sm:$0xf]
        %v709 = vsel %vm614, %v518, %v708
        %710 = vst [vmem:[%s611 + $0x9c] sm:$0xf] %v709
        %711 = vst.msk [vmem:[%s611 + $0xa0] sm:$0xf] %vm200, %v527
        %v712 = vld [vmem:[%s611 + $0xa4] sm:$0x1]
        %v713 = vsel %vm620, %v528, %v712
        %714 = vst [vmem:[%s611 + $0xa4] sm:$0x1] %v713
        %v715 = vld [vmem:[%s611 + $0xa8] sm:$0xf]
        %v716 = vsel %vm614, %v535, %v715
        %717 = vst [vmem:[%s611 + $0xa8] sm:$0xf] %v716
        %718 = vst.msk [vmem:[%s611 + $0xac] sm:$0xf] %vm200, %v544
        %v719 = vld [vmem:[%s611 + $0xb0] sm:$0x1]
        %v720 = vsel %vm620, %v545, %v719
        %721 = vst [vmem:[%s611 + $0xb0] sm:$0x1] %v720
        %v722 = vld [vmem:[%s611 + $0xb4] sm:$0xf]
        %v723 = vsel %vm614, %v552, %v722
        %724 = vst [vmem:[%s611 + $0xb4] sm:$0xf] %v723
        %725 = vst.msk [vmem:[%s611 + $0xb8] sm:$0xf] %vm200, %v561
        %v726 = vld [vmem:[%s611 + $0xbc] sm:$0x1]
        %v727 = vsel %vm620, %v562, %v726
        %728 = vst [vmem:[%s611 + $0xbc] sm:$0x1] %v727
        %s729 = smul.u32 %s19, 3
        %s730 = smul.addr %s729, 4
        %s731 = scalar_lea.vmem [#allocation2], %s730
        %v732 = vld [vmem:[%s731] sm:$0xf]
        %v733 = vld [vmem:[%s731 + $0x4] sm:$0xf]
        %v734 = vld [vmem:[%s731 + $0xc] sm:$0xf]
        %v735 = vld [vmem:[%s731 + $0x10] sm:$0xf]
        %v736 = vld [vmem:[%s731 + $0x18] sm:$0xf]
        %v737 = vld [vmem:[%s731 + $0x1c] sm:$0xf]
        %v738 = vld [vmem:[%s731 + $0x24] sm:$0xf]
        %v739 = vld [vmem:[%s731 + $0x28] sm:$0xf]
        %v740 = vld [vmem:[%s731 + $0x30] sm:$0xf]
        %v741 = vld [vmem:[%s731 + $0x34] sm:$0xf]
        %v742 = vld [vmem:[%s731 + $0x3c] sm:$0xf]
        %v743 = vld [vmem:[%s731 + $0x40] sm:$0xf]
        %v744 = vld [vmem:[%s731 + $0x48] sm:$0xf]
        %v745 = vld [vmem:[%s731 + $0x4c] sm:$0xf]
        %v746 = vld [vmem:[%s731 + $0x54] sm:$0xf]
        %v747 = vld [vmem:[%s731 + $0x58] sm:$0xf]
        %v748 = vld [vmem:[%s731 + $0x60] sm:$0xf]
        %v749 = vld [vmem:[%s731 + $0x64] sm:$0xf]
        %v750 = vld [vmem:[%s731 + $0x6c] sm:$0xf]
        %v751 = vld [vmem:[%s731 + $0x70] sm:$0xf]
        %v752 = vld [vmem:[%s731 + $0x78] sm:$0xf]
        %v753 = vld [vmem:[%s731 + $0x7c] sm:$0xf]
        %v754 = vld [vmem:[%s731 + $0x84] sm:$0xf]
        %v755 = vld [vmem:[%s731 + $0x88] sm:$0xf]
        %v756 = vld [vmem:[%s731 + $0x90] sm:$0xf]
        %v757 = vld [vmem:[%s731 + $0x94] sm:$0xf]
        %v758 = vld [vmem:[%s731 + $0x9c] sm:$0xf]
        %v759 = vld [vmem:[%s731 + $0xa0] sm:$0xf]
        %v760 = vld [vmem:[%s731 + $0xa8] sm:$0xf]
        %v761 = vld [vmem:[%s731 + $0xac] sm:$0xf]
        %v762 = vld [vmem:[%s731 + $0xb4] sm:$0xf]
        %v763 = vld [vmem:[%s731 + $0xb8] sm:$0xf]
        %v764 = vld [vmem:[%s731 + $0x8] sm:$0x1]
        %v765 = vld [vmem:[%s731 + $0x14] sm:$0x1]
        %v766 = vld [vmem:[%s731 + $0x20] sm:$0x1]
        %v767 = vld [vmem:[%s731 + $0x2c] sm:$0x1]
        %v768 = vld [vmem:[%s731 + $0x38] sm:$0x1]
        %v769 = vld [vmem:[%s731 + $0x44] sm:$0x1]
        %v770 = vld [vmem:[%s731 + $0x50] sm:$0x1]
        %v771 = vld [vmem:[%s731 + $0x5c] sm:$0x1]
        %v772 = vld [vmem:[%s731 + $0x68] sm:$0x1]
        %v773 = vld [vmem:[%s731 + $0x74] sm:$0x1]
        %v774 = vld [vmem:[%s731 + $0x80] sm:$0x1]
        %v775 = vld [vmem:[%s731 + $0x8c] sm:$0x1]
        %v776 = vld [vmem:[%s731 + $0x98] sm:$0x1]
        %v777 = vld [vmem:[%s731 + $0xa4] sm:$0x1]
        %v778 = vld [vmem:[%s731 + $0xb0] sm:$0x1]
        %v779 = vld [vmem:[%s731 + $0xbc] sm:$0x1]
        %v780 = vld [vmem:[%s731] sm:$0xe]
        %v781 = vld [vmem:[%s731 + $0xc] sm:$0xe]
        %v782 = vld [vmem:[%s731 + $0x18] sm:$0xe]
        %v783 = vld [vmem:[%s731 + $0x24] sm:$0xe]
        %v784 = vld [vmem:[%s731 + $0x30] sm:$0xe]
        %v785 = vld [vmem:[%s731 + $0x3c] sm:$0xe]
        %v786 = vld [vmem:[%s731 + $0x48] sm:$0xe]
        %v787 = vld [vmem:[%s731 + $0x54] sm:$0xe]
        %v788 = vld [vmem:[%s731 + $0x60] sm:$0xe]
        %v789 = vld [vmem:[%s731 + $0x6c] sm:$0xe]
        %v790 = vld [vmem:[%s731 + $0x78] sm:$0xe]
        %v791 = vld [vmem:[%s731 + $0x84] sm:$0xe]
        %v792 = vld [vmem:[%s731 + $0x90] sm:$0xe]
        %v793 = vld [vmem:[%s731 + $0x9c] sm:$0xe]
        %v794 = vld [vmem:[%s731 + $0xa8] sm:$0xe]
        %v795 = vld [vmem:[%s731 + $0xb4] sm:$0xe]
        %s796 = sadd.s32 %s19, 1
        %s797 = smul.u32 %s796, 3
        %s798 = smul.addr %s797, 4
        %s799 = scalar_lea.vmem [#allocation2], %s798
        %v800 = vld [vmem:[%s799] sm:$0xf]
        %v801 = vld [vmem:[%s799 + $0x4] sm:$0xf]
        %v802 = vld [vmem:[%s799 + $0xc] sm:$0xf]
        %v803 = vld [vmem:[%s799 + $0x10] sm:$0xf]
        %v804 = vld [vmem:[%s799 + $0x18] sm:$0xf]
        %v805 = vld [vmem:[%s799 + $0x1c] sm:$0xf]
        %v806 = vld [vmem:[%s799 + $0x24] sm:$0xf]
        %v807 = vld [vmem:[%s799 + $0x28] sm:$0xf]
        %v808 = vld [vmem:[%s799 + $0x30] sm:$0xf]
        %v809 = vld [vmem:[%s799 + $0x34] sm:$0xf]
        %v810 = vld [vmem:[%s799 + $0x3c] sm:$0xf]
        %v811 = vld [vmem:[%s799 + $0x40] sm:$0xf]
        %v812 = vld [vmem:[%s799 + $0x48] sm:$0xf]
        %v813 = vld [vmem:[%s799 + $0x4c] sm:$0xf]
        %v814 = vld [vmem:[%s799 + $0x54] sm:$0xf]
        %v815 = vld [vmem:[%s799 + $0x58] sm:$0xf]
        %v816 = vld [vmem:[%s799 + $0x60] sm:$0xf]
        %v817 = vld [vmem:[%s799 + $0x64] sm:$0xf]
        %v818 = vld [vmem:[%s799 + $0x6c] sm:$0xf]
        %v819 = vld [vmem:[%s799 + $0x70] sm:$0xf]
        %v820 = vld [vmem:[%s799 + $0x78] sm:$0xf]
        %v821 = vld [vmem:[%s799 + $0x7c] sm:$0xf]
        %v822 = vld [vmem:[%s799 + $0x84] sm:$0xf]
        %v823 = vld [vmem:[%s799 + $0x88] sm:$0xf]
        %v824 = vld [vmem:[%s799 + $0x90] sm:$0xf]
        %v825 = vld [vmem:[%s799 + $0x94] sm:$0xf]
        %v826 = vld [vmem:[%s799 + $0x9c] sm:$0xf]
        %v827 = vld [vmem:[%s799 + $0xa0] sm:$0xf]
        %v828 = vld [vmem:[%s799 + $0xa8] sm:$0xf]
        %v829 = vld [vmem:[%s799 + $0xac] sm:$0xf]
        %v830 = vld [vmem:[%s799 + $0xb4] sm:$0xf]
        %v831 = vld [vmem:[%s799 + $0xb8] sm:$0xf]
        %v832 = vld [vmem:[%s799 + $0x8] sm:$0x1]
        %v833 = vld [vmem:[%s799 + $0x14] sm:$0x1]
        %v834 = vld [vmem:[%s799 + $0x20] sm:$0x1]
        %v835 = vld [vmem:[%s799 + $0x2c] sm:$0x1]
        %v836 = vld [vmem:[%s799 + $0x38] sm:$0x1]
        %v837 = vld [vmem:[%s799 + $0x44] sm:$0x1]
        %v838 = vld [vmem:[%s799 + $0x50] sm:$0x1]
        %v839 = vld [vmem:[%s799 + $0x5c] sm:$0x1]
        %v840 = vld [vmem:[%s799 + $0x68] sm:$0x1]
        %v841 = vld [vmem:[%s799 + $0x74] sm:$0x1]
        %v842 = vld [vmem:[%s799 + $0x80] sm:$0x1]
        %v843 = vld [vmem:[%s799 + $0x8c] sm:$0x1]
        %v844 = vld [vmem:[%s799 + $0x98] sm:$0x1]
        %v845 = vld [vmem:[%s799 + $0xa4] sm:$0x1]
        %v846 = vld [vmem:[%s799 + $0xb0] sm:$0x1]
        %v847 = vld [vmem:[%s799 + $0xbc] sm:$0x1]
        %v848 = vld [vmem:[%s799] sm:$0xe]
        %v849 = vld [vmem:[%s799 + $0xc] sm:$0xe]
        %v850 = vld [vmem:[%s799 + $0x18] sm:$0xe]
        %v851 = vld [vmem:[%s799 + $0x24] sm:$0xe]
        %v852 = vld [vmem:[%s799 + $0x30] sm:$0xe]
        %v853 = vld [vmem:[%s799 + $0x3c] sm:$0xe]
        %v854 = vld [vmem:[%s799 + $0x48] sm:$0xe]
        %v855 = vld [vmem:[%s799 + $0x54] sm:$0xe]
        %v856 = vld [vmem:[%s799 + $0x60] sm:$0xe]
        %v857 = vld [vmem:[%s799 + $0x6c] sm:$0xe]
        %v858 = vld [vmem:[%s799 + $0x78] sm:$0xe]
        %v859 = vld [vmem:[%s799 + $0x84] sm:$0xe]
        %v860 = vld [vmem:[%s799 + $0x90] sm:$0xe]
        %v861 = vld [vmem:[%s799 + $0x9c] sm:$0xe]
        %v862 = vld [vmem:[%s799 + $0xa8] sm:$0xe]
        %v863 = vld [vmem:[%s799 + $0xb4] sm:$0xe]
        %v896 = vunpack.c.l.b16 %v732
        %v897 = vunpack.c.l.b16 %v733
        %v898 = vunpack.c.l.b16 %v734
        %v899 = vunpack.c.l.b16 %v735
        %v900 = vunpack.c.l.b16 %v736
        %v901 = vunpack.c.l.b16 %v737
        %v902 = vunpack.c.l.b16 %v738
        %v903 = vunpack.c.l.b16 %v739
        %v904 = vunpack.c.l.b16 %v740
        %v905 = vunpack.c.l.b16 %v741
        %v906 = vunpack.c.l.b16 %v742
        %v907 = vunpack.c.l.b16 %v743
        %v908 = vunpack.c.l.b16 %v744
        %v909 = vunpack.c.l.b16 %v745
        %v910 = vunpack.c.l.b16 %v746
        %v911 = vunpack.c.l.b16 %v747
        %v912 = vunpack.c.l.b16 %v748
        %v913 = vunpack.c.l.b16 %v749
        %v914 = vunpack.c.l.b16 %v750
        %v915 = vunpack.c.l.b16 %v751
        %v916 = vunpack.c.l.b16 %v752
        %v917 = vunpack.c.l.b16 %v753
        %v918 = vunpack.c.l.b16 %v754
        %v919 = vunpack.c.l.b16 %v755
        %v920 = vunpack.c.l.b16 %v756
        %v921 = vunpack.c.l.b16 %v757
        %v922 = vunpack.c.l.b16 %v758
        %v923 = vunpack.c.l.b16 %v759
        %v924 = vunpack.c.l.b16 %v760
        %v925 = vunpack.c.l.b16 %v761
        %v926 = vunpack.c.l.b16 %v762
        %v927 = vunpack.c.l.b16 %v763
        %v928 = vpack.c.b16 %v897, %v896
        %v929 = vpack.c.b16 %v899, %v898
        %v930 = vpack.c.b16 %v901, %v900
        %v931 = vpack.c.b16 %v903, %v902
        %v932 = vpack.c.b16 %v905, %v904
        %v933 = vpack.c.b16 %v907, %v906
        %v934 = vpack.c.b16 %v909, %v908
        %v935 = vpack.c.b16 %v911, %v910
        %v936 = vpack.c.b16 %v913, %v912
        %v937 = vpack.c.b16 %v915, %v914
        %v938 = vpack.c.b16 %v917, %v916
        %v939 = vpack.c.b16 %v919, %v918
        %v940 = vpack.c.b16 %v921, %v920
        %v941 = vpack.c.b16 %v923, %v922
        %v942 = vpack.c.b16 %v925, %v924
        %v943 = vpack.c.b16 %v927, %v926
        %v960 = vunpack.c.l.b16 %v764
        %v961 = vunpack.c.l.b16 %v765
        %v962 = vunpack.c.l.b16 %v766
        %v963 = vunpack.c.l.b16 %v767
        %v964 = vunpack.c.l.b16 %v768
        %v965 = vunpack.c.l.b16 %v769
        %v966 = vunpack.c.l.b16 %v770
        %v967 = vunpack.c.l.b16 %v771
        %v968 = vunpack.c.l.b16 %v772
        %v969 = vunpack.c.l.b16 %v773
        %v970 = vunpack.c.l.b16 %v774
        %v971 = vunpack.c.l.b16 %v775
        %v972 = vunpack.c.l.b16 %v776
        %v973 = vunpack.c.l.b16 %v777
        %v974 = vunpack.c.l.b16 %v778
        %v975 = vunpack.c.l.b16 %v779
        %v976 = vpack.c.b16 %v960, %v960
        %v977 = vpack.c.b16 %v961, %v961
        %v978 = vpack.c.b16 %v962, %v962
        %v979 = vpack.c.b16 %v963, %v963
        %v980 = vpack.c.b16 %v964, %v964
        %v981 = vpack.c.b16 %v965, %v965
        %v982 = vpack.c.b16 %v966, %v966
        %v983 = vpack.c.b16 %v967, %v967
        %v984 = vpack.c.b16 %v968, %v968
        %v985 = vpack.c.b16 %v969, %v969
        %v986 = vpack.c.b16 %v970, %v970
        %v987 = vpack.c.b16 %v971, %v971
        %v988 = vpack.c.b16 %v972, %v972
        %v989 = vpack.c.b16 %v973, %v973
        %v990 = vpack.c.b16 %v974, %v974
        %v991 = vpack.c.b16 %v975, %v975
        %vm992 = vsmask.f32 7424
        %v994 = vshrl.u32 %v928, 16
        %v996 = vshll.u32 %v928, 16
        %v998 = vrot.slane %v996, 1
        %v999 = vor.u32 %v994, %v998
        %v1001 = vshll.u32 %v976, 16
        %v1003 = vrot.slane %v1001, 1
        %v1004 = vsel %vm992, %v999, %v1003
        %v1006 = vshrl.u32 %v929, 16
        %v1008 = vshll.u32 %v929, 16
        %v1010 = vrot.slane %v1008, 1
        %v1011 = vor.u32 %v1006, %v1010
        %v1013 = vshll.u32 %v977, 16
        %v1015 = vrot.slane %v1013, 1
        %v1016 = vsel %vm992, %v1011, %v1015
        %v1018 = vshrl.u32 %v930, 16
        %v1020 = vshll.u32 %v930, 16
        %v1022 = vrot.slane %v1020, 1
        %v1023 = vor.u32 %v1018, %v1022
        %v1025 = vshll.u32 %v978, 16
        %v1027 = vrot.slane %v1025, 1
        %v1028 = vsel %vm992, %v1023, %v1027
        %v1030 = vshrl.u32 %v931, 16
        %v1032 = vshll.u32 %v931, 16
        %v1034 = vrot.slane %v1032, 1
        %v1035 = vor.u32 %v1030, %v1034
        %v1037 = vshll.u32 %v979, 16
        %v1039 = vrot.slane %v1037, 1
        %v1040 = vsel %vm992, %v1035, %v1039
        %v1042 = vshrl.u32 %v932, 16
        %v1044 = vshll.u32 %v932, 16
        %v1046 = vrot.slane %v1044, 1
        %v1047 = vor.u32 %v1042, %v1046
        %v1049 = vshll.u32 %v980, 16
        %v1051 = vrot.slane %v1049, 1
        %v1052 = vsel %vm992, %v1047, %v1051
        %v1054 = vshrl.u32 %v933, 16
        %v1056 = vshll.u32 %v933, 16
        %v1058 = vrot.slane %v1056, 1
        %v1059 = vor.u32 %v1054, %v1058
        %v1061 = vshll.u32 %v981, 16
        %v1063 = vrot.slane %v1061, 1
        %v1064 = vsel %vm992, %v1059, %v1063
        %v1066 = vshrl.u32 %v934, 16
        %v1068 = vshll.u32 %v934, 16
        %v1070 = vrot.slane %v1068, 1
        %v1071 = vor.u32 %v1066, %v1070
        %v1073 = vshll.u32 %v982, 16
        %v1075 = vrot.slane %v1073, 1
        %v1076 = vsel %vm992, %v1071, %v1075
        %v1078 = vshrl.u32 %v935, 16
        %v1080 = vshll.u32 %v935, 16
        %v1082 = vrot.slane %v1080, 1
        %v1083 = vor.u32 %v1078, %v1082
        %v1085 = vshll.u32 %v983, 16
        %v1087 = vrot.slane %v1085, 1
        %v1088 = vsel %vm992, %v1083, %v1087
        %v1090 = vshrl.u32 %v936, 16
        %v1092 = vshll.u32 %v936, 16
        %v1094 = vrot.slane %v1092, 1
        %v1095 = vor.u32 %v1090, %v1094
        %v1097 = vshll.u32 %v984, 16
        %v1099 = vrot.slane %v1097, 1
        %v1100 = vsel %vm992, %v1095, %v1099
        %v1102 = vshrl.u32 %v937, 16
        %v1104 = vshll.u32 %v937, 16
        %v1106 = vrot.slane %v1104, 1
        %v1107 = vor.u32 %v1102, %v1106
        %v1109 = vshll.u32 %v985, 16
        %v1111 = vrot.slane %v1109, 1
        %v1112 = vsel %vm992, %v1107, %v1111
        %v1114 = vshrl.u32 %v938, 16
        %v1116 = vshll.u32 %v938, 16
        %v1118 = vrot.slane %v1116, 1
        %v1119 = vor.u32 %v1114, %v1118
        %v1121 = vshll.u32 %v986, 16
        %v1123 = vrot.slane %v1121, 1
        %v1124 = vsel %vm992, %v1119, %v1123
        %v1126 = vshrl.u32 %v939, 16
        %v1128 = vshll.u32 %v939, 16
        %v1130 = vrot.slane %v1128, 1
        %v1131 = vor.u32 %v1126, %v1130
        %v1133 = vshll.u32 %v987, 16
        %v1135 = vrot.slane %v1133, 1
        %v1136 = vsel %vm992, %v1131, %v1135
        %v1138 = vshrl.u32 %v940, 16
        %v1140 = vshll.u32 %v940, 16
        %v1142 = vrot.slane %v1140, 1
        %v1143 = vor.u32 %v1138, %v1142
        %v1145 = vshll.u32 %v988, 16
        %v1147 = vrot.slane %v1145, 1
        %v1148 = vsel %vm992, %v1143, %v1147
        %v1150 = vshrl.u32 %v941, 16
        %v1152 = vshll.u32 %v941, 16
        %v1154 = vrot.slane %v1152, 1
        %v1155 = vor.u32 %v1150, %v1154
        %v1157 = vshll.u32 %v989, 16
        %v1159 = vrot.slane %v1157, 1
        %v1160 = vsel %vm992, %v1155, %v1159
        %v1162 = vshrl.u32 %v942, 16
        %v1164 = vshll.u32 %v942, 16
        %v1166 = vrot.slane %v1164, 1
        %v1167 = vor.u32 %v1162, %v1166
        %v1169 = vshll.u32 %v990, 16
        %v1171 = vrot.slane %v1169, 1
        %v1172 = vsel %vm992, %v1167, %v1171
        %v1174 = vshrl.u32 %v943, 16
        %v1176 = vshll.u32 %v943, 16
        %v1178 = vrot.slane %v1176, 1
        %v1179 = vor.u32 %v1174, %v1178
        %v1181 = vshll.u32 %v991, 16
        %v1183 = vrot.slane %v1181, 1
        %v1184 = vsel %vm992, %v1179, %v1183
        %1185 = vrot.lane.b32.xlu0 %v1004, 4
        %v1186 = vpop.permute.xlu0 %1185
        %1187 = vrot.lane.b32.xlu0 %v1016, 4
        %v1188 = vpop.permute.xlu0 %1187
        %1189 = vrot.lane.b32.xlu0 %v1028, 4
        %v1190 = vpop.permute.xlu0 %1189
        %1191 = vrot.lane.b32.xlu0 %v1040, 4
        %v1192 = vpop.permute.xlu0 %1191
        %1193 = vrot.lane.b32.xlu0 %v1052, 4
        %v1194 = vpop.permute.xlu0 %1193
        %1195 = vrot.lane.b32.xlu0 %v1064, 4
        %v1196 = vpop.permute.xlu0 %1195
        %1197 = vrot.lane.b32.xlu0 %v1076, 4
        %v1198 = vpop.permute.xlu0 %1197
        %1199 = vrot.lane.b32.xlu0 %v1088, 4
        %v1200 = vpop.permute.xlu0 %1199
        %1201 = vrot.lane.b32.xlu0 %v1100, 4
        %v1202 = vpop.permute.xlu0 %1201
        %1203 = vrot.lane.b32.xlu0 %v1112, 4
        %v1204 = vpop.permute.xlu0 %1203
        %1205 = vrot.lane.b32.xlu0 %v1124, 4
        %v1206 = vpop.permute.xlu0 %1205
        %1207 = vrot.lane.b32.xlu0 %v1136, 4
        %v1208 = vpop.permute.xlu0 %1207
        %1209 = vrot.lane.b32.xlu0 %v1148, 4
        %v1210 = vpop.permute.xlu0 %1209
        %1211 = vrot.lane.b32.xlu0 %v1160, 4
        %v1212 = vpop.permute.xlu0 %1211
        %1213 = vrot.lane.b32.xlu0 %v1172, 4
        %v1214 = vpop.permute.xlu0 %1213
        %1215 = vrot.lane.b32.xlu0 %v1184, 4
        %v1216 = vpop.permute.xlu0 %1215
        %v1233 = vunpack.c.l.b16 %v780
        %v1234 = vunpack.c.l.b16 %v781
        %v1235 = vunpack.c.l.b16 %v782
        %v1236 = vunpack.c.l.b16 %v783
        %v1237 = vunpack.c.l.b16 %v784
        %v1238 = vunpack.c.l.b16 %v785
        %v1239 = vunpack.c.l.b16 %v786
        %v1240 = vunpack.c.l.b16 %v787
        %v1241 = vunpack.c.l.b16 %v788
        %v1242 = vunpack.c.l.b16 %v789
        %v1243 = vunpack.c.l.b16 %v790
        %v1244 = vunpack.c.l.b16 %v791
        %v1245 = vunpack.c.l.b16 %v792
        %v1246 = vunpack.c.l.b16 %v793
        %v1247 = vunpack.c.l.b16 %v794
        %v1248 = vunpack.c.l.b16 %v795
        %v1249 = vpack.c.b16 %v897, %v1233
        %v1250 = vpack.c.b16 %v899, %v1234
        %v1251 = vpack.c.b16 %v901, %v1235
        %v1252 = vpack.c.b16 %v903, %v1236
        %v1253 = vpack.c.b16 %v905, %v1237
        %v1254 = vpack.c.b16 %v907, %v1238
        %v1255 = vpack.c.b16 %v909, %v1239
        %v1256 = vpack.c.b16 %v911, %v1240
        %v1257 = vpack.c.b16 %v913, %v1241
        %v1258 = vpack.c.b16 %v915, %v1242
        %v1259 = vpack.c.b16 %v917, %v1243
        %v1260 = vpack.c.b16 %v919, %v1244
        %v1261 = vpack.c.b16 %v921, %v1245
        %v1262 = vpack.c.b16 %v923, %v1246
        %v1263 = vpack.c.b16 %v925, %v1247
        %v1264 = vpack.c.b16 %v927, %v1248
        %vm1265 = vcmask 1046528
        %v1266 = vrot.slane %v1249, 1
        %v1267 = vrot.slane %v976, 1
        %v1268 = vsel %vm1265, %v1266, %v1267
        %v1269 = vrot.slane %v1250, 1
        %v1270 = vrot.slane %v977, 1
        %v1271 = vsel %vm1265, %v1269, %v1270
        %v1272 = vrot.slane %v1251, 1
        %v1273 = vrot.slane %v978, 1
        %v1274 = vsel %vm1265, %v1272, %v1273
        %v1275 = vrot.slane %v1252, 1
        %v1276 = vrot.slane %v979, 1
        %v1277 = vsel %vm1265, %v1275, %v1276
        %v1278 = vrot.slane %v1253, 1
        %v1279 = vrot.slane %v980, 1
        %v1280 = vsel %vm1265, %v1278, %v1279
        %v1281 = vrot.slane %v1254, 1
        %v1282 = vrot.slane %v981, 1
        %v1283 = vsel %vm1265, %v1281, %v1282
        %v1284 = vrot.slane %v1255, 1
        %v1285 = vrot.slane %v982, 1
        %v1286 = vsel %vm1265, %v1284, %v1285
        %v1287 = vrot.slane %v1256, 1
        %v1288 = vrot.slane %v983, 1
        %v1289 = vsel %vm1265, %v1287, %v1288
        %v1290 = vrot.slane %v1257, 1
        %v1291 = vrot.slane %v984, 1
        %v1292 = vsel %vm1265, %v1290, %v1291
        %v1293 = vrot.slane %v1258, 1
        %v1294 = vrot.slane %v985, 1
        %v1295 = vsel %vm1265, %v1293, %v1294
        %v1296 = vrot.slane %v1259, 1
        %v1297 = vrot.slane %v986, 1
        %v1298 = vsel %vm1265, %v1296, %v1297
        %v1299 = vrot.slane %v1260, 1
        %v1300 = vrot.slane %v987, 1
        %v1301 = vsel %vm1265, %v1299, %v1300
        %v1302 = vrot.slane %v1261, 1
        %v1303 = vrot.slane %v988, 1
        %v1304 = vsel %vm1265, %v1302, %v1303
        %v1305 = vrot.slane %v1262, 1
        %v1306 = vrot.slane %v989, 1
        %v1307 = vsel %vm1265, %v1305, %v1306
        %v1308 = vrot.slane %v1263, 1
        %v1309 = vrot.slane %v990, 1
        %v1310 = vsel %vm1265, %v1308, %v1309
        %v1311 = vrot.slane %v1264, 1
        %v1312 = vrot.slane %v991, 1
        %v1313 = vsel %vm1265, %v1311, %v1312
        %1314 = vrot.lane.b32.xlu0 %v1268, 8
        %v1315 = vpop.permute.xlu0 %1314
        %1316 = vrot.lane.b32.xlu0 %v1271, 8
        %v1317 = vpop.permute.xlu0 %1316
        %1318 = vrot.lane.b32.xlu0 %v1274, 8
        %v1319 = vpop.permute.xlu0 %1318
        %1320 = vrot.lane.b32.xlu0 %v1277, 8
        %v1321 = vpop.permute.xlu0 %1320
        %1322 = vrot.lane.b32.xlu0 %v1280, 8
        %v1323 = vpop.permute.xlu0 %1322
        %1324 = vrot.lane.b32.xlu0 %v1283, 8
        %v1325 = vpop.permute.xlu0 %1324
        %1326 = vrot.lane.b32.xlu0 %v1286, 8
        %v1327 = vpop.permute.xlu0 %1326
        %1328 = vrot.lane.b32.xlu0 %v1289, 8
        %v1329 = vpop.permute.xlu0 %1328
        %1330 = vrot.lane.b32.xlu0 %v1292, 8
        %v1331 = vpop.permute.xlu0 %1330
        %1332 = vrot.lane.b32.xlu0 %v1295, 8
        %v1333 = vpop.permute.xlu0 %1332
        %1334 = vrot.lane.b32.xlu0 %v1298, 8
        %v1335 = vpop.permute.xlu0 %1334
        %1336 = vrot.lane.b32.xlu0 %v1301, 8
        %v1337 = vpop.permute.xlu0 %1336
        %1338 = vrot.lane.b32.xlu0 %v1304, 8
        %v1339 = vpop.permute.xlu0 %1338
        %1340 = vrot.lane.b32.xlu0 %v1307, 8
        %v1341 = vpop.permute.xlu0 %1340
        %1342 = vrot.lane.b32.xlu0 %v1310, 8
        %v1343 = vpop.permute.xlu0 %1342
        %1344 = vrot.lane.b32.xlu0 %v1313, 8
        %v1345 = vpop.permute.xlu0 %1344
        %v1378 = vunpack.c.l.b16 %v800
        %v1379 = vunpack.c.l.b16 %v801
        %v1380 = vunpack.c.l.b16 %v802
        %v1381 = vunpack.c.l.b16 %v803
        %v1382 = vunpack.c.l.b16 %v804
        %v1383 = vunpack.c.l.b16 %v805
        %v1384 = vunpack.c.l.b16 %v806
        %v1385 = vunpack.c.l.b16 %v807
        %v1386 = vunpack.c.l.b16 %v808
        %v1387 = vunpack.c.l.b16 %v809
        %v1388 = vunpack.c.l.b16 %v810
        %v1389 = vunpack.c.l.b16 %v811
        %v1390 = vunpack.c.l.b16 %v812
        %v1391 = vunpack.c.l.b16 %v813
        %v1392 = vunpack.c.l.b16 %v814
        %v1393 = vunpack.c.l.b16 %v815
        %v1394 = vunpack.c.l.b16 %v816
        %v1395 = vunpack.c.l.b16 %v817
        %v1396 = vunpack.c.l.b16 %v818
        %v1397 = vunpack.c.l.b16 %v819
        %v1398 = vunpack.c.l.b16 %v820
        %v1399 = vunpack.c.l.b16 %v821
        %v1400 = vunpack.c.l.b16 %v822
        %v1401 = vunpack.c.l.b16 %v823
        %v1402 = vunpack.c.l.b16 %v824
        %v1403 = vunpack.c.l.b16 %v825
        %v1404 = vunpack.c.l.b16 %v826
        %v1405 = vunpack.c.l.b16 %v827
        %v1406 = vunpack.c.l.b16 %v828
        %v1407 = vunpack.c.l.b16 %v829
        %v1408 = vunpack.c.l.b16 %v830
        %v1409 = vunpack.c.l.b16 %v831
        %v1410 = vpack.c.b16 %v1379, %v1378
        %v1411 = vpack.c.b16 %v1381, %v1380
        %v1412 = vpack.c.b16 %v1383, %v1382
        %v1413 = vpack.c.b16 %v1385, %v1384
        %v1414 = vpack.c.b16 %v1387, %v1386
        %v1415 = vpack.c.b16 %v1389, %v1388
        %v1416 = vpack.c.b16 %v1391, %v1390
        %v1417 = vpack.c.b16 %v1393, %v1392
        %v1418 = vpack.c.b16 %v1395, %v1394
        %v1419 = vpack.c.b16 %v1397, %v1396
        %v1420 = vpack.c.b16 %v1399, %v1398
        %v1421 = vpack.c.b16 %v1401, %v1400
        %v1422 = vpack.c.b16 %v1403, %v1402
        %v1423 = vpack.c.b16 %v1405, %v1404
        %v1424 = vpack.c.b16 %v1407, %v1406
        %v1425 = vpack.c.b16 %v1409, %v1408
        %1426 = vrot.lane.b32.xlu0 %v1410, 12
        %v1427 = vpop.permute.xlu0 %1426
        %1428 = vrot.lane.b32.xlu0 %v1411, 12
        %v1429 = vpop.permute.xlu0 %1428
        %1430 = vrot.lane.b32.xlu0 %v1412, 12
        %v1431 = vpop.permute.xlu0 %1430
        %1432 = vrot.lane.b32.xlu0 %v1413, 12
        %v1433 = vpop.permute.xlu0 %1432
        %1434 = vrot.lane.b32.xlu0 %v1414, 12
        %v1435 = vpop.permute.xlu0 %1434
        %1436 = vrot.lane.b32.xlu0 %v1415, 12
        %v1437 = vpop.permute.xlu0 %1436
        %1438 = vrot.lane.b32.xlu0 %v1416, 12
        %v1439 = vpop.permute.xlu0 %1438
        %1440 = vrot.lane.b32.xlu0 %v1417, 12
        %v1441 = vpop.permute.xlu0 %1440
        %1442 = vrot.lane.b32.xlu0 %v1418, 12
        %v1443 = vpop.permute.xlu0 %1442
        %1444 = vrot.lane.b32.xlu0 %v1419, 12
        %v1445 = vpop.permute.xlu0 %1444
        %1446 = vrot.lane.b32.xlu0 %v1420, 12
        %v1447 = vpop.permute.xlu0 %1446
        %1448 = vrot.lane.b32.xlu0 %v1421, 12
        %v1449 = vpop.permute.xlu0 %1448
        %1450 = vrot.lane.b32.xlu0 %v1422, 12
        %v1451 = vpop.permute.xlu0 %1450
        %1452 = vrot.lane.b32.xlu0 %v1423, 12
        %v1453 = vpop.permute.xlu0 %1452
        %1454 = vrot.lane.b32.xlu0 %v1424, 12
        %v1455 = vpop.permute.xlu0 %1454
        %1456 = vrot.lane.b32.xlu0 %v1425, 12
        %v1457 = vpop.permute.xlu0 %1456
        %v1474 = vunpack.c.l.b16 %v832
        %v1475 = vunpack.c.l.b16 %v833
        %v1476 = vunpack.c.l.b16 %v834
        %v1477 = vunpack.c.l.b16 %v835
        %v1478 = vunpack.c.l.b16 %v836
        %v1479 = vunpack.c.l.b16 %v837
        %v1480 = vunpack.c.l.b16 %v838
        %v1481 = vunpack.c.l.b16 %v839
        %v1482 = vunpack.c.l.b16 %v840
        %v1483 = vunpack.c.l.b16 %v841
        %v1484 = vunpack.c.l.b16 %v842
        %v1485 = vunpack.c.l.b16 %v843
        %v1486 = vunpack.c.l.b16 %v844
        %v1487 = vunpack.c.l.b16 %v845
        %v1488 = vunpack.c.l.b16 %v846
        %v1489 = vunpack.c.l.b16 %v847
        %v1490 = vpack.c.b16 %v1474, %v1474
        %v1491 = vpack.c.b16 %v1475, %v1475
        %v1492 = vpack.c.b16 %v1476, %v1476
        %v1493 = vpack.c.b16 %v1477, %v1477
        %v1494 = vpack.c.b16 %v1478, %v1478
        %v1495 = vpack.c.b16 %v1479, %v1479
        %v1496 = vpack.c.b16 %v1480, %v1480
        %v1497 = vpack.c.b16 %v1481, %v1481
        %v1498 = vpack.c.b16 %v1482, %v1482
        %v1499 = vpack.c.b16 %v1483, %v1483
        %v1500 = vpack.c.b16 %v1484, %v1484
        %v1501 = vpack.c.b16 %v1485, %v1485
        %v1502 = vpack.c.b16 %v1486, %v1486
        %v1503 = vpack.c.b16 %v1487, %v1487
        %v1504 = vpack.c.b16 %v1488, %v1488
        %v1505 = vpack.c.b16 %v1489, %v1489
        %v1507 = vshrl.u32 %v1410, 16
        %v1509 = vshll.u32 %v1410, 16
        %v1511 = vrot.slane %v1509, 1
        %v1512 = vor.u32 %v1507, %v1511
        %v1514 = vshll.u32 %v1490, 16
        %v1516 = vrot.slane %v1514, 1
        %v1517 = vsel %vm992, %v1512, %v1516
        %v1519 = vshrl.u32 %v1411, 16
        %v1521 = vshll.u32 %v1411, 16
        %v1523 = vrot.slane %v1521, 1
        %v1524 = vor.u32 %v1519, %v1523
        %v1526 = vshll.u32 %v1491, 16
        %v1528 = vrot.slane %v1526, 1
        %v1529 = vsel %vm992, %v1524, %v1528
        %v1531 = vshrl.u32 %v1412, 16
        %v1533 = vshll.u32 %v1412, 16
        %v1535 = vrot.slane %v1533, 1
        %v1536 = vor.u32 %v1531, %v1535
        %v1538 = vshll.u32 %v1492, 16
        %v1540 = vrot.slane %v1538, 1
        %v1541 = vsel %vm992, %v1536, %v1540
        %v1543 = vshrl.u32 %v1413, 16
        %v1545 = vshll.u32 %v1413, 16
        %v1547 = vrot.slane %v1545, 1
        %v1548 = vor.u32 %v1543, %v1547
        %v1550 = vshll.u32 %v1493, 16
        %v1552 = vrot.slane %v1550, 1
        %v1553 = vsel %vm992, %v1548, %v1552
        %v1555 = vshrl.u32 %v1414, 16
        %v1557 = vshll.u32 %v1414, 16
        %v1559 = vrot.slane %v1557, 1
        %v1560 = vor.u32 %v1555, %v1559
        %v1562 = vshll.u32 %v1494, 16
        %v1564 = vrot.slane %v1562, 1
        %v1565 = vsel %vm992, %v1560, %v1564
        %v1567 = vshrl.u32 %v1415, 16
        %v1569 = vshll.u32 %v1415, 16
        %v1571 = vrot.slane %v1569, 1
        %v1572 = vor.u32 %v1567, %v1571
        %v1574 = vshll.u32 %v1495, 16
        %v1576 = vrot.slane %v1574, 1
        %v1577 = vsel %vm992, %v1572, %v1576
        %v1579 = vshrl.u32 %v1416, 16
        %v1581 = vshll.u32 %v1416, 16
        %v1583 = vrot.slane %v1581, 1
        %v1584 = vor.u32 %v1579, %v1583
        %v1586 = vshll.u32 %v1496, 16
        %v1588 = vrot.slane %v1586, 1
        %v1589 = vsel %vm992, %v1584, %v1588
        %v1591 = vshrl.u32 %v1417, 16
        %v1593 = vshll.u32 %v1417, 16
        %v1595 = vrot.slane %v1593, 1
        %v1596 = vor.u32 %v1591, %v1595
        %v1598 = vshll.u32 %v1497, 16
        %v1600 = vrot.slane %v1598, 1
        %v1601 = vsel %vm992, %v1596, %v1600
        %v1603 = vshrl.u32 %v1418, 16
        %v1605 = vshll.u32 %v1418, 16
        %v1607 = vrot.slane %v1605, 1
        %v1608 = vor.u32 %v1603, %v1607
        %v1610 = vshll.u32 %v1498, 16
        %v1612 = vrot.slane %v1610, 1
        %v1613 = vsel %vm992, %v1608, %v1612
        %v1615 = vshrl.u32 %v1419, 16
        %v1617 = vshll.u32 %v1419, 16
        %v1619 = vrot.slane %v1617, 1
        %v1620 = vor.u32 %v1615, %v1619
        %v1622 = vshll.u32 %v1499, 16
        %v1624 = vrot.slane %v1622, 1
        %v1625 = vsel %vm992, %v1620, %v1624
        %v1627 = vshrl.u32 %v1420, 16
        %v1629 = vshll.u32 %v1420, 16
        %v1631 = vrot.slane %v1629, 1
        %v1632 = vor.u32 %v1627, %v1631
        %v1634 = vshll.u32 %v1500, 16
        %v1636 = vrot.slane %v1634, 1
        %v1637 = vsel %vm992, %v1632, %v1636
        %v1639 = vshrl.u32 %v1421, 16
        %v1641 = vshll.u32 %v1421, 16
        %v1643 = vrot.slane %v1641, 1
        %v1644 = vor.u32 %v1639, %v1643
        %v1646 = vshll.u32 %v1501, 16
        %v1648 = vrot.slane %v1646, 1
        %v1649 = vsel %vm992, %v1644, %v1648
        %v1651 = vshrl.u32 %v1422, 16
        %v1653 = vshll.u32 %v1422, 16
        %v1655 = vrot.slane %v1653, 1
        %v1656 = vor.u32 %v1651, %v1655
        %v1658 = vshll.u32 %v1502, 16
        %v1660 = vrot.slane %v1658, 1
        %v1661 = vsel %vm992, %v1656, %v1660
        %v1663 = vshrl.u32 %v1423, 16
        %v1665 = vshll.u32 %v1423, 16
        %v1667 = vrot.slane %v1665, 1
        %v1668 = vor.u32 %v1663, %v1667
        %v1670 = vshll.u32 %v1503, 16
        %v1672 = vrot.slane %v1670, 1
        %v1673 = vsel %vm992, %v1668, %v1672
        %v1675 = vshrl.u32 %v1424, 16
        %v1677 = vshll.u32 %v1424, 16
        %v1679 = vrot.slane %v1677, 1
        %v1680 = vor.u32 %v1675, %v1679
        %v1682 = vshll.u32 %v1504, 16
        %v1684 = vrot.slane %v1682, 1
        %v1685 = vsel %vm992, %v1680, %v1684
        %v1687 = vshrl.u32 %v1425, 16
        %v1689 = vshll.u32 %v1425, 16
        %v1691 = vrot.slane %v1689, 1
        %v1692 = vor.u32 %v1687, %v1691
        %v1694 = vshll.u32 %v1505, 16
        %v1696 = vrot.slane %v1694, 1
        %v1697 = vsel %vm992, %v1692, %v1696
        %1698 = vrot.lane.b32.xlu0 %v1517, 16
        %v1699 = vpop.permute.xlu0 %1698
        %1700 = vrot.lane.b32.xlu0 %v1529, 16
        %v1701 = vpop.permute.xlu0 %1700
        %1702 = vrot.lane.b32.xlu0 %v1541, 16
        %v1703 = vpop.permute.xlu0 %1702
        %1704 = vrot.lane.b32.xlu0 %v1553, 16
        %v1705 = vpop.permute.xlu0 %1704
        %1706 = vrot.lane.b32.xlu0 %v1565, 16
        %v1707 = vpop.permute.xlu0 %1706
        %1708 = vrot.lane.b32.xlu0 %v1577, 16
        %v1709 = vpop.permute.xlu0 %1708
        %1710 = vrot.lane.b32.xlu0 %v1589, 16
        %v1711 = vpop.permute.xlu0 %1710
        %1712 = vrot.lane.b32.xlu0 %v1601, 16
        %v1713 = vpop.permute.xlu0 %1712
        %1714 = vrot.lane.b32.xlu0 %v1613, 16
        %v1715 = vpop.permute.xlu0 %1714
        %1716 = vrot.lane.b32.xlu0 %v1625, 16
        %v1717 = vpop.permute.xlu0 %1716
        %1718 = vrot.lane.b32.xlu0 %v1637, 16
        %v1719 = vpop.permute.xlu0 %1718
        %1720 = vrot.lane.b32.xlu0 %v1649, 16
        %v1721 = vpop.permute.xlu0 %1720
        %1722 = vrot.lane.b32.xlu0 %v1661, 16
        %v1723 = vpop.permute.xlu0 %1722
        %1724 = vrot.lane.b32.xlu0 %v1673, 16
        %v1725 = vpop.permute.xlu0 %1724
        %1726 = vrot.lane.b32.xlu0 %v1685, 16
        %v1727 = vpop.permute.xlu0 %1726
        %1728 = vrot.lane.b32.xlu0 %v1697, 16
        %v1729 = vpop.permute.xlu0 %1728
        %v1746 = vunpack.c.l.b16 %v848
        %v1747 = vunpack.c.l.b16 %v849
        %v1748 = vunpack.c.l.b16 %v850
        %v1749 = vunpack.c.l.b16 %v851
        %v1750 = vunpack.c.l.b16 %v852
        %v1751 = vunpack.c.l.b16 %v853
        %v1752 = vunpack.c.l.b16 %v854
        %v1753 = vunpack.c.l.b16 %v855
        %v1754 = vunpack.c.l.b16 %v856
        %v1755 = vunpack.c.l.b16 %v857
        %v1756 = vunpack.c.l.b16 %v858
        %v1757 = vunpack.c.l.b16 %v859
        %v1758 = vunpack.c.l.b16 %v860
        %v1759 = vunpack.c.l.b16 %v861
        %v1760 = vunpack.c.l.b16 %v862
        %v1761 = vunpack.c.l.b16 %v863
        %v1762 = vpack.c.b16 %v1379, %v1746
        %v1763 = vpack.c.b16 %v1381, %v1747
        %v1764 = vpack.c.b16 %v1383, %v1748
        %v1765 = vpack.c.b16 %v1385, %v1749
        %v1766 = vpack.c.b16 %v1387, %v1750
        %v1767 = vpack.c.b16 %v1389, %v1751
        %v1768 = vpack.c.b16 %v1391, %v1752
        %v1769 = vpack.c.b16 %v1393, %v1753
        %v1770 = vpack.c.b16 %v1395, %v1754
        %v1771 = vpack.c.b16 %v1397, %v1755
        %v1772 = vpack.c.b16 %v1399, %v1756
        %v1773 = vpack.c.b16 %v1401, %v1757
        %v1774 = vpack.c.b16 %v1403, %v1758
        %v1775 = vpack.c.b16 %v1405, %v1759
        %v1776 = vpack.c.b16 %v1407, %v1760
        %v1777 = vpack.c.b16 %v1409, %v1761
        %v1778 = vrot.slane %v1762, 1
        %v1779 = vrot.slane %v1490, 1
        %v1780 = vsel %vm1265, %v1778, %v1779
        %v1781 = vrot.slane %v1763, 1
        %v1782 = vrot.slane %v1491, 1
        %v1783 = vsel %vm1265, %v1781, %v1782
        %v1784 = vrot.slane %v1764, 1
        %v1785 = vrot.slane %v1492, 1
        %v1786 = vsel %vm1265, %v1784, %v1785
        %v1787 = vrot.slane %v1765, 1
        %v1788 = vrot.slane %v1493, 1
        %v1789 = vsel %vm1265, %v1787, %v1788
        %v1790 = vrot.slane %v1766, 1
        %v1791 = vrot.slane %v1494, 1
        %v1792 = vsel %vm1265, %v1790, %v1791
        %v1793 = vrot.slane %v1767, 1
        %v1794 = vrot.slane %v1495, 1
        %v1795 = vsel %vm1265, %v1793, %v1794
        %v1796 = vrot.slane %v1768, 1
        %v1797 = vrot.slane %v1496, 1
        %v1798 = vsel %vm1265, %v1796, %v1797
        %v1799 = vrot.slane %v1769, 1
        %v1800 = vrot.slane %v1497, 1
        %v1801 = vsel %vm1265, %v1799, %v1800
        %v1802 = vrot.slane %v1770, 1
        %v1803 = vrot.slane %v1498, 1
        %v1804 = vsel %vm1265, %v1802, %v1803
        %v1805 = vrot.slane %v1771, 1
        %v1806 = vrot.slane %v1499, 1
        %v1807 = vsel %vm1265, %v1805, %v1806
        %v1808 = vrot.slane %v1772, 1
        %v1809 = vrot.slane %v1500, 1
        %v1810 = vsel %vm1265, %v1808, %v1809
        %v1811 = vrot.slane %v1773, 1
        %v1812 = vrot.slane %v1501, 1
        %v1813 = vsel %vm1265, %v1811, %v1812
        %v1814 = vrot.slane %v1774, 1
        %v1815 = vrot.slane %v1502, 1
        %v1816 = vsel %vm1265, %v1814, %v1815
        %v1817 = vrot.slane %v1775, 1
        %v1818 = vrot.slane %v1503, 1
        %v1819 = vsel %vm1265, %v1817, %v1818
        %v1820 = vrot.slane %v1776, 1
        %v1821 = vrot.slane %v1504, 1
        %v1822 = vsel %vm1265, %v1820, %v1821
        %v1823 = vrot.slane %v1777, 1
        %v1824 = vrot.slane %v1505, 1
        %v1825 = vsel %vm1265, %v1823, %v1824
        %1826 = vrot.lane.b32.xlu0 %v1780, 20
        %v1827 = vpop.permute.xlu0 %1826
        %1828 = vrot.lane.b32.xlu0 %v1783, 20
        %v1829 = vpop.permute.xlu0 %1828
        %1830 = vrot.lane.b32.xlu0 %v1786, 20
        %v1831 = vpop.permute.xlu0 %1830
        %1832 = vrot.lane.b32.xlu0 %v1789, 20
        %v1833 = vpop.permute.xlu0 %1832
        %1834 = vrot.lane.b32.xlu0 %v1792, 20
        %v1835 = vpop.permute.xlu0 %1834
        %1836 = vrot.lane.b32.xlu0 %v1795, 20
        %v1837 = vpop.permute.xlu0 %1836
        %1838 = vrot.lane.b32.xlu0 %v1798, 20
        %v1839 = vpop.permute.xlu0 %1838
        %1840 = vrot.lane.b32.xlu0 %v1801, 20
        %v1841 = vpop.permute.xlu0 %1840
        %1842 = vrot.lane.b32.xlu0 %v1804, 20
        %v1843 = vpop.permute.xlu0 %1842
        %1844 = vrot.lane.b32.xlu0 %v1807, 20
        %v1845 = vpop.permute.xlu0 %1844
        %1846 = vrot.lane.b32.xlu0 %v1810, 20
        %v1847 = vpop.permute.xlu0 %1846
        %1848 = vrot.lane.b32.xlu0 %v1813, 20
        %v1849 = vpop.permute.xlu0 %1848
        %1850 = vrot.lane.b32.xlu0 %v1816, 20
        %v1851 = vpop.permute.xlu0 %1850
        %1852 = vrot.lane.b32.xlu0 %v1819, 20
        %v1853 = vpop.permute.xlu0 %1852
        %1854 = vrot.lane.b32.xlu0 %v1822, 20
        %v1855 = vpop.permute.xlu0 %1854
        %1856 = vrot.lane.b32.xlu0 %v1825, 20
        %v1857 = vpop.permute.xlu0 %1856
        %vm1858 = vcmask 31744
        %v1860 = vsel %vm1858, %v928, %v1186
        %v1862 = vsel %vm1858, %v929, %v1188
        %v1864 = vsel %vm1858, %v930, %v1190
        %v1866 = vsel %vm1858, %v931, %v1192
        %v1868 = vsel %vm1858, %v932, %v1194
        %v1870 = vsel %vm1858, %v933, %v1196
        %v1872 = vsel %vm1858, %v934, %v1198
        %v1874 = vsel %vm1858, %v935, %v1200
        %v1876 = vsel %vm1858, %v936, %v1202
        %v1878 = vsel %vm1858, %v937, %v1204
        %v1880 = vsel %vm1858, %v938, %v1206
        %v1882 = vsel %vm1858, %v939, %v1208
        %v1884 = vsel %vm1858, %v940, %v1210
        %v1886 = vsel %vm1858, %v941, %v1212
        %v1888 = vsel %vm1858, %v942, %v1214
        %v1890 = vsel %vm1858, %v943, %v1216
        %vm1891 = vcmask 64512
        %v1893 = vsel %vm1891, %v1860, %v1315
        %v1895 = vsel %vm1891, %v1862, %v1317
        %v1897 = vsel %vm1891, %v1864, %v1319
        %v1899 = vsel %vm1891, %v1866, %v1321
        %v1901 = vsel %vm1891, %v1868, %v1323
        %v1903 = vsel %vm1891, %v1870, %v1325
        %v1905 = vsel %vm1891, %v1872, %v1327
        %v1907 = vsel %vm1891, %v1874, %v1329
        %v1909 = vsel %vm1891, %v1876, %v1331
        %v1911 = vsel %vm1891, %v1878, %v1333
        %v1913 = vsel %vm1891, %v1880, %v1335
        %v1915 = vsel %vm1891, %v1882, %v1337
        %v1917 = vsel %vm1891, %v1884, %v1339
        %v1919 = vsel %vm1891, %v1886, %v1341
        %v1921 = vsel %vm1891, %v1888, %v1343
        %v1923 = vsel %vm1891, %v1890, %v1345
        %vm1924 = vcmask 97280
        %v1926 = vsel %vm1924, %v1893, %v1427
        %v1928 = vsel %vm1924, %v1895, %v1429
        %v1930 = vsel %vm1924, %v1897, %v1431
        %v1932 = vsel %vm1924, %v1899, %v1433
        %v1934 = vsel %vm1924, %v1901, %v1435
        %v1936 = vsel %vm1924, %v1903, %v1437
        %v1938 = vsel %vm1924, %v1905, %v1439
        %v1940 = vsel %vm1924, %v1907, %v1441
        %v1942 = vsel %vm1924, %v1909, %v1443
        %v1944 = vsel %vm1924, %v1911, %v1445
        %v1946 = vsel %vm1924, %v1913, %v1447
        %v1948 = vsel %vm1924, %v1915, %v1449
        %v1950 = vsel %vm1924, %v1917, %v1451
        %v1952 = vsel %vm1924, %v1919, %v1453
        %v1954 = vsel %vm1924, %v1921, %v1455
        %v1956 = vsel %vm1924, %v1923, %v1457
        %vm1957 = vcmask 130048
        %v1959 = vsel %vm1957, %v1926, %v1699
        %v1961 = vsel %vm1957, %v1928, %v1701
        %v1963 = vsel %vm1957, %v1930, %v1703
        %v1965 = vsel %vm1957, %v1932, %v1705
        %v1967 = vsel %vm1957, %v1934, %v1707
        %v1969 = vsel %vm1957, %v1936, %v1709
        %v1971 = vsel %vm1957, %v1938, %v1711
        %v1973 = vsel %vm1957, %v1940, %v1713
        %v1975 = vsel %vm1957, %v1942, %v1715
        %v1977 = vsel %vm1957, %v1944, %v1717
        %v1979 = vsel %vm1957, %v1946, %v1719
        %v1981 = vsel %vm1957, %v1948, %v1721
        %v1983 = vsel %vm1957, %v1950, %v1723
        %v1985 = vsel %vm1957, %v1952, %v1725
        %v1987 = vsel %vm1957, %v1954, %v1727
        %v1989 = vsel %vm1957, %v1956, %v1729
        %vm1990 = vcmask 162816
        %v1992 = vsel %vm1990, %v1959, %v1827
        %v1994 = vsel %vm1990, %v1961, %v1829
        %v1996 = vsel %vm1990, %v1963, %v1831
        %v1998 = vsel %vm1990, %v1965, %v1833
        %v2000 = vsel %vm1990, %v1967, %v1835
        %v2002 = vsel %vm1990, %v1969, %v1837
        %v2004 = vsel %vm1990, %v1971, %v1839
        %v2006 = vsel %vm1990, %v1973, %v1841
        %v2008 = vsel %vm1990, %v1975, %v1843
        %v2010 = vsel %vm1990, %v1977, %v1845
        %v2012 = vsel %vm1990, %v1979, %v1847
        %v2014 = vsel %vm1990, %v1981, %v1849
        %v2016 = vsel %vm1990, %v1983, %v1851
        %v2018 = vsel %vm1990, %v1985, %v1853
        %v2020 = vsel %vm1990, %v1987, %v1855
        %v2022 = vsel %vm1990, %v1989, %v1857
        %v2023 = vld [vmem:[%s198] sm:$0xf]
        %v2024 = vld [vmem:[%s198 + $0x4] sm:$0xf]
        %v2025 = vld [vmem:[%s198 + $0x8] sm:$0xf]
        %v2029 = vunpack.c.l.b16 %v2023
        %v2030 = vunpack.c.l.b16 %v2024
        %v2031 = vunpack.c.l.b16 %v2025
        %v2032 = vpack.c.b16 %v2030, %v2029
        %v2033 = vpack.c.b16 %v2031, %v2031
        %vm2035 = vcmask 195584
        %v2036 = vsel %vm2035, %v1992, 0
        %v2038 = vsel %vm2035, %v1994, 0
        %v2040 = vsel %vm2035, %v1996, 0
        %v2042 = vsel %vm2035, %v1998, 0
        %v2044 = vsel %vm2035, %v2000, 0
        %v2046 = vsel %vm2035, %v2002, 0
        %v2048 = vsel %vm2035, %v2004, 0
        %v2050 = vsel %vm2035, %v2006, 0
        %v2052 = vsel %vm2035, %v2008, 0
        %v2054 = vsel %vm2035, %v2010, 0
        %v2056 = vsel %vm2035, %v2012, 0
        %v2058 = vsel %vm2035, %v2014, 0
        %v2060 = vsel %vm2035, %v2016, 0
        %v2062 = vsel %vm2035, %v2018, 0
        %v2064 = vsel %vm2035, %v2020, 0
        %v2066 = vsel %vm2035, %v2022, 0
        %vm2068 = vcmask 1043456
        %v2070 = vsel %vm2068, %v2033, 0
        %2072 = vmatprep.subr.bf16.mxu0 0
        %2073 = vmatpush1.bf16.msra.mxu0 %v2032
        %2074 = vmatprep.subr.bf16.mxu0 0
        %2075 = vmatpush1.bf16.msra.mxu0 %v2070
        %2076 = vmatprep.subr.bf16.mxu0 0
        %2077 = vmatpush1.bf16.msra.mxu0 0
        %2078 = vmatprep.subr.bf16.mxu0 0
        %2079 = vmatpush1.bf16.msra.mxu0 0
        %2080 = vmatprep.subr.bf16.mxu0 0
        %2081 = vmatpush1.bf16.msra.mxu0 0
        %2082 = vmatprep.subr.bf16.mxu0 0
        %2083 = vmatpush1.bf16.msra.mxu0 0
        %2084 = vmatprep.subr.bf16.mxu0 0
        %2085 = vmatpush1.bf16.msra.mxu0 0
        %2086 = vmatprep.subr.bf16.mxu0 0
        %2087 = vmatpush1.bf16.msra.mxu0 0
        %2088 = vmatprep.subr.bf16.mxu0 0
        %2089 = vmatpush1.bf16.msra.mxu0 0
        %2090 = vmatprep.subr.bf16.mxu0 0
        %2091 = vmatpush1.bf16.msra.mxu0 0
        %2092 = vmatprep.subr.bf16.mxu0 0
        %2093 = vmatpush1.bf16.msra.mxu0 0
        %2094 = vmatprep.subr.bf16.mxu0 0
        %2095 = vmatpush1.bf16.msra.mxu0 0
        %2096 = vmatprep.subr.bf16.mxu0 0
        %2097 = vmatpush1.bf16.msra.mxu0 0
        %2098 = vmatprep.subr.bf16.mxu0 0
        %2099 = vmatpush1.bf16.msra.mxu0 0
        %2100 = vmatprep.subr.bf16.mxu0 0
        %2101 = vmatpush1.bf16.msra.mxu0 0
        %2102 = vmatprep.subr.bf16.mxu0 0
        %2103 = vmatpush1.bf16.msra.mxu0 0
        %2104 = vmatprep.mubr.bf16.mxu0 0
        %2105 = vmatmul.mubr.bf16.gmra.mrb[0].mxu0 %v2036
        %v2106 = vpop.f32.mrb[0].mxu0
        %v2107 = vadd.f32 0.0, %v2106
        %v2108 = vpop.f32.mrb[0].mxu0
        %v2109 = vpop.f32.mrb[0].mxu0
        %v2110 = vadd.f32 0.0, %v2109
        %v2111 = vpop.f32.mrb[0].mxu0
        %2112 = vmatprep.mubr.bf16.mxu0 0
        %2113 = vmatmul.mubr.bf16.gmra.mrb[0].mxu0 %v2038
        %v2114 = vpop.f32.mrb[0].mxu0
        %v2115 = vadd.f32 0.0, %v2114
        %v2116 = vpop.f32.mrb[0].mxu0
        %v2117 = vpop.f32.mrb[0].mxu0
        %v2118 = vadd.f32 0.0, %v2117
        %v2119 = vpop.f32.mrb[0].mxu0
        %2120 = vmatprep.mubr.bf16.mxu0 0
        %2121 = vmatmul.mubr.bf16.gmra.mrb[0].mxu0 %v2040
        %v2122 = vpop.f32.mrb[0].mxu0
        %v2123 = vadd.f32 0.0, %v2122
        %v2124 = vpop.f32.mrb[0].mxu0
        %v2125 = vpop.f32.mrb[0].mxu0
        %v2126 = vadd.f32 0.0, %v2125
        %v2127 = vpop.f32.mrb[0].mxu0
        %2128 = vmatprep.mubr.bf16.mxu0 0
        %2129 = vmatmul.mubr.bf16.gmra.mrb[0].mxu0 %v2042
        %v2130 = vpop.f32.mrb[0].mxu0
        %v2131 = vadd.f32 0.0, %v2130
        %v2132 = vpop.f32.mrb[0].mxu0
        %v2133 = vpop.f32.mrb[0].mxu0
        %v2134 = vadd.f32 0.0, %v2133
        %v2135 = vpop.f32.mrb[0].mxu0
        %2136 = vmatprep.mubr.bf16.mxu0 0
        %2137 = vmatmul.mubr.bf16.gmra.mrb[0].mxu0 %v2044
        %v2138 = vpop.f32.mrb[0].mxu0
        %v2139 = vadd.f32 0.0, %v2138
        %v2140 = vpop.f32.mrb[0].mxu0
        %v2141 = vpop.f32.mrb[0].mxu0
        %v2142 = vadd.f32 0.0, %v2141
        %v2143 = vpop.f32.mrb[0].mxu0
        %2144 = vmatprep.mubr.bf16.mxu0 0
        %2145 = vmatmul.mubr.bf16.gmra.mrb[0].mxu0 %v2046
        %v2146 = vpop.f32.mrb[0].mxu0
        %v2147 = vadd.f32 0.0, %v2146
        %v2148 = vpop.f32.mrb[0].mxu0
        %v2149 = vpop.f32.mrb[0].mxu0
        %v2150 = vadd.f32 0.0, %v2149
        %v2151 = vpop.f32.mrb[0].mxu0
        %2152 = vmatprep.mubr.bf16.mxu0 0
        %2153 = vmatmul.mubr.bf16.gmra.mrb[0].mxu0 %v2048
        %v2154 = vpop.f32.mrb[0].mxu0
        %v2155 = vadd.f32 0.0, %v2154
        %v2156 = vpop.f32.mrb[0].mxu0
        %v2157 = vpop.f32.mrb[0].mxu0
        %v2158 = vadd.f32 0.0, %v2157
        %v2159 = vpop.f32.mrb[0].mxu0
        %2160 = vmatprep.mubr.bf16.mxu0 0
        %2161 = vmatmul.mubr.bf16.gmra.mrb[0].mxu0 %v2050
        %v2162 = vpop.f32.mrb[0].mxu0
        %v2163 = vadd.f32 0.0, %v2162
        %v2164 = vpop.f32.mrb[0].mxu0
        %v2165 = vpop.f32.mrb[0].mxu0
        %v2166 = vadd.f32 0.0, %v2165
        %v2167 = vpop.f32.mrb[0].mxu0
        %2168 = vmatprep.mubr.bf16.mxu0 0
        %2169 = vmatmul.mubr.bf16.gmra.mrb[0].mxu0 %v2052
        %v2170 = vpop.f32.mrb[0].mxu0
        %v2171 = vadd.f32 0.0, %v2170
        %v2172 = vpop.f32.mrb[0].mxu0
        %v2173 = vpop.f32.mrb[0].mxu0
        %v2174 = vadd.f32 0.0, %v2173
        %v2175 = vpop.f32.mrb[0].mxu0
        %2176 = vmatprep.mubr.bf16.mxu0 0
        %2177 = vmatmul.mubr.bf16.gmra.mrb[0].mxu0 %v2054
        %v2178 = vpop.f32.mrb[0].mxu0
        %v2179 = vadd.f32 0.0, %v2178
        %v2180 = vpop.f32.mrb[0].mxu0
        %v2181 = vpop.f32.mrb[0].mxu0
        %v2182 = vadd.f32 0.0, %v2181
        %v2183 = vpop.f32.mrb[0].mxu0
        %2184 = vmatprep.mubr.bf16.mxu0 0
        %2185 = vmatmul.mubr.bf16.gmra.mrb[0].mxu0 %v2056
        %v2186 = vpop.f32.mrb[0].mxu0
        %v2187 = vadd.f32 0.0, %v2186
        %v2188 = vpop.f32.mrb[0].mxu0
        %v2189 = vpop.f32.mrb[0].mxu0
        %v2190 = vadd.f32 0.0, %v2189
        %v2191 = vpop.f32.mrb[0].mxu0
        %2192 = vmatprep.mubr.bf16.mxu0 0
        %2193 = vmatmul.mubr.bf16.gmra.mrb[0].mxu0 %v2058
        %v2194 = vpop.f32.mrb[0].mxu0
        %v2195 = vadd.f32 0.0, %v2194
        %v2196 = vpop.f32.mrb[0].mxu0
        %v2197 = vpop.f32.mrb[0].mxu0
        %v2198 = vadd.f32 0.0, %v2197
        %v2199 = vpop.f32.mrb[0].mxu0
        %2200 = vmatprep.mubr.bf16.mxu0 0
        %2201 = vmatmul.mubr.bf16.gmra.mrb[0].mxu0 %v2060
        %v2202 = vpop.f32.mrb[0].mxu0
        %v2203 = vadd.f32 0.0, %v2202
        %v2204 = vpop.f32.mrb[0].mxu0
        %v2205 = vpop.f32.mrb[0].mxu0
        %v2206 = vadd.f32 0.0, %v2205
        %v2207 = vpop.f32.mrb[0].mxu0
        %2208 = vmatprep.mubr.bf16.mxu0 0
        %2209 = vmatmul.mubr.bf16.gmra.mrb[0].mxu0 %v2062
        %v2210 = vpop.f32.mrb[0].mxu0
        %v2211 = vadd.f32 0.0, %v2210
        %v2212 = vpop.f32.mrb[0].mxu0
        %v2213 = vpop.f32.mrb[0].mxu0
        %v2214 = vadd.f32 0.0, %v2213
        %v2215 = vpop.f32.mrb[0].mxu0
        %2216 = vmatprep.mubr.bf16.mxu0 0
        %2217 = vmatmul.mubr.bf16.gmra.mrb[0].mxu0 %v2064
        %v2218 = vpop.f32.mrb[0].mxu0
        %v2219 = vadd.f32 0.0, %v2218
        %v2220 = vpop.f32.mrb[0].mxu0
        %v2221 = vpop.f32.mrb[0].mxu0
        %v2222 = vadd.f32 0.0, %v2221
        %v2223 = vpop.f32.mrb[0].mxu0
        %2224 = vmatprep.mubr.bf16.mxu0 0
        %2225 = vmatmul.mubr.bf16.gmra.mrb[0].mxu0 %v2066
        %v2226 = vpop.f32.mrb[0].mxu0
        %v2227 = vadd.f32 0.0, %v2226
        %v2228 = vpop.f32.mrb[0].mxu0
        %v2229 = vpop.f32.mrb[0].mxu0
        %v2230 = vadd.f32 0.0, %v2229
        %v2231 = vpop.f32.mrb[0].mxu0
        %2232 = vdwg.mxu0
        %v2233 = vld [vmem:[%s2] sm:$0x1]
        %v2235 = vlaneseq
        %v2236 = vshrl.u32 %v2235, 7
        %v2237 = vsub.s32 0, %v2236
        %v2238 = vrot.slane %v2233, %v2237
        %v2240 = vadd.f32 %v2107, %v2238
        %v2241 = vadd.f32 %v2110, %v2238
        %v2242 = vadd.f32 %v2115, %v2238
        %v2243 = vadd.f32 %v2118, %v2238
        %v2244 = vadd.f32 %v2123, %v2238
        %v2245 = vadd.f32 %v2126, %v2238
        %v2246 = vadd.f32 %v2131, %v2238
        %v2247 = vadd.f32 %v2134, %v2238
        %v2248 = vadd.f32 %v2139, %v2238
        %v2249 = vadd.f32 %v2142, %v2238
        %v2250 = vadd.f32 %v2147, %v2238
        %v2251 = vadd.f32 %v2150, %v2238
        %v2252 = vadd.f32 %v2155, %v2238
        %v2253 = vadd.f32 %v2158, %v2238
        %v2254 = vadd.f32 %v2163, %v2238
        %v2255 = vadd.f32 %v2166, %v2238
        %v2256 = vadd.f32 %v2171, %v2238
        %v2257 = vadd.f32 %v2174, %v2238
        %v2258 = vadd.f32 %v2179, %v2238
        %v2259 = vadd.f32 %v2182, %v2238
        %v2260 = vadd.f32 %v2187, %v2238
        %v2261 = vadd.f32 %v2190, %v2238
        %v2262 = vadd.f32 %v2195, %v2238
        %v2263 = vadd.f32 %v2198, %v2238
        %v2264 = vadd.f32 %v2203, %v2238
        %v2265 = vadd.f32 %v2206, %v2238
        %v2266 = vadd.f32 %v2211, %v2238
        %v2267 = vadd.f32 %v2214, %v2238
        %v2268 = vadd.f32 %v2219, %v2238
        %v2269 = vadd.f32 %v2222, %v2238
        %v2270 = vadd.f32 %v2227, %v2238
        %v2271 = vadd.f32 %v2230, %v2238
        %2272 = vst.msk [vmem:[%s188] sm:$0xff] %vm1858, %v2240
        %2273 = vst.msk [vmem:[%s188 + $0x8] sm:$0xff] %vm1858, %v2241
        %2274 = vst.msk [vmem:[%s188 + $0x10] sm:$0xff] %vm1858, %v2242
        %2275 = vst.msk [vmem:[%s188 + $0x18] sm:$0xff] %vm1858, %v2243
        %2276 = vst.msk [vmem:[%s188 + $0x20] sm:$0xff] %vm1858, %v2244
        %2277 = vst.msk [vmem:[%s188 + $0x28] sm:$0xff] %vm1858, %v2245
        %2278 = vst.msk [vmem:[%s188 + $0x30] sm:$0xff] %vm1858, %v2246
        %2279 = vst.msk [vmem:[%s188 + $0x38] sm:$0xff] %vm1858, %v2247
        %2280 = vst.msk [vmem:[%s188 + $0x40] sm:$0xff] %vm1858, %v2248
        %2281 = vst.msk [vmem:[%s188 + $0x48] sm:$0xff] %vm1858, %v2249
        %2282 = vst.msk [vmem:[%s188 + $0x50] sm:$0xff] %vm1858, %v2250
        %2283 = vst.msk [vmem:[%s188 + $0x58] sm:$0xff] %vm1858, %v2251
        %2284 = vst.msk [vmem:[%s188 + $0x60] sm:$0xff] %vm1858, %v2252
        %2285 = vst.msk [vmem:[%s188 + $0x68] sm:$0xff] %vm1858, %v2253
        %2286 = vst.msk [vmem:[%s188 + $0x70] sm:$0xff] %vm1858, %v2254
        %2287 = vst.msk [vmem:[%s188 + $0x78] sm:$0xff] %vm1858, %v2255
        %2288 = vst.msk [vmem:[%s188 + $0x80] sm:$0xff] %vm1858, %v2256
        %2289 = vst.msk [vmem:[%s188 + $0x88] sm:$0xff] %vm1858, %v2257
        %2290 = vst.msk [vmem:[%s188 + $0x90] sm:$0xff] %vm1858, %v2258
        %2291 = vst.msk [vmem:[%s188 + $0x98] sm:$0xff] %vm1858, %v2259
        %2292 = vst.msk [vmem:[%s188 + $0xa0] sm:$0xff] %vm1858, %v2260
        %2293 = vst.msk [vmem:[%s188 + $0xa8] sm:$0xff] %vm1858, %v2261
        %2294 = vst.msk [vmem:[%s188 + $0xb0] sm:$0xff] %vm1858, %v2262
        %2295 = vst.msk [vmem:[%s188 + $0xb8] sm:$0xff] %vm1858, %v2263
        %2296 = vst.msk [vmem:[%s188 + $0xc0] sm:$0xff] %vm1858, %v2264
        %2297 = vst.msk [vmem:[%s188 + $0xc8] sm:$0xff] %vm1858, %v2265
        %2298 = vst.msk [vmem:[%s188 + $0xd0] sm:$0xff] %vm1858, %v2266
        %2299 = vst.msk [vmem:[%s188 + $0xd8] sm:$0xff] %vm1858, %v2267
        %2300 = vst.msk [vmem:[%s188 + $0xe0] sm:$0xff] %vm1858, %v2268
        %2301 = vst.msk [vmem:[%s188 + $0xe8] sm:$0xff] %vm1858, %v2269
        %2302 = vst.msk [vmem:[%s188 + $0xf0] sm:$0xff] %vm1858, %v2270
        %2303 = vst.msk [vmem:[%s188 + $0xf8] sm:$0xff] %vm1858, %v2271
        %s2304 = sand.u32 %s109, 1
        %s2305 = sand.u32 %s109, 1
        %s2306 = smul.addr %s2305, 256
        %s2307 = scalar_lea.vmem [#allocation3], %s2306
        // Predicated region
        $region33: #{tpu_custom_call.1} parent=31 // pred_check
          %p2308 = pneg %p119
        $region34: #{tpu_custom_call.1} parent=31 // pred_check_branch
          %2310 = sbr.rel (%p2308) target = $region36
        $region35: #{tpu_custom_call.1} parent=31 // pred_region
          %s2311 = smul.addr %s19, 2
          %s2312 = smul.addr %s18, 64
          %s2313 = sadd.s32 %s2311, %s2312
          %s2314 = smul.addr %s2313, 8
          %s2315 = scalar_lea.vmem %s3, %s2314
          // Predicated region
          $region37: #{tpu_custom_call.1} parent=35 // pred_check
            _
          $region38: #{tpu_custom_call.1} parent=35 // pred_check_branch
            %2317 = sbr.rel (0) target = $region40
          $region39: #{tpu_custom_call.1} parent=35 // pred_region
            // Predicated region
            $region41: #{tpu_custom_call.1} parent=39 // pred_check
              _
            $region42: #{tpu_custom_call.1} parent=39 // pred_check_branch
              %2319 = sbr.rel (0) target = $region44
            $region43: #{tpu_custom_call.1} parent=39 // pred_region
              // Predicated region
              $region56: #{tpu_custom_call.1} parent=43 // pred_check
                _
              $region57: #{tpu_custom_call.1} parent=43 // pred_check_branch
                %2396 = sbr.rel (0) target = $region59
              $region58: #{tpu_custom_call.1} parent=43 // pred_region
                loop: start=0, step=1, limit=1
                $region60: #{tpu_custom_call.1} parent=58 // loop_pre_header
                  _
                $region61: #{tpu_custom_call.1} parent=58 // loop_header
                  %s2398 = sphi 0, %s2402
                  %p2399 = scmp.ge.s32.totalorder %s2398, 1
                  %s2403 = sphi %s2307, %s2307
                  %s2404 = sphi %s2315, %s2315
                $region62: #{tpu_custom_call.1} parent=58 // loop_header_branch
                  %2401 = sbr.rel (%p2399) target = $region66
                $region63: #{tpu_custom_call.1} parent=58 // loop_body
                  %v2405 = vld [vmem:[%s2403] sm:$0xff]
                  %2406 = vst [vmem:[%s2404] sm:$0xff] %v2405
                  %v2407 = vld [vmem:[%s2403 + $0x8] sm:$0xff]
                  %2408 = vst [vmem:[%s2404 + $0x8] sm:$0xff] %v2407
                  %v2409 = vld [vmem:[%s2403 + $0x10] sm:$0xff]
                  %2410 = vst [vmem:[%s2404 + $0x20] sm:$0xff] %v2409
                  %v2411 = vld [vmem:[%s2403 + $0x18] sm:$0xff]
                  %2412 = vst [vmem:[%s2404 + $0x28] sm:$0xff] %v2411
                  %v2413 = vld [vmem:[%s2403 + $0x20] sm:$0xff]
                  %2414 = vst [vmem:[%s2404 + $0x40] sm:$0xff] %v2413
                  %v2415 = vld [vmem:[%s2403 + $0x28] sm:$0xff]
                  %2416 = vst [vmem:[%s2404 + $0x48] sm:$0xff] %v2415
                  %v2417 = vld [vmem:[%s2403 + $0x30] sm:$0xff]
                  %2418 = vst [vmem:[%s2404 + $0x60] sm:$0xff] %v2417
                  %v2419 = vld [vmem:[%s2403 + $0x38] sm:$0xff]
                  %2420 = vst [vmem:[%s2404 + $0x68] sm:$0xff] %v2419
                  %v2421 = vld [vmem:[%s2403 + $0x40] sm:$0xff]
                  %2422 = vst [vmem:[%s2404 + $0x80] sm:$0xff] %v2421
                  %v2423 = vld [vmem:[%s2403 + $0x48] sm:$0xff]
                  %2424 = vst [vmem:[%s2404 + $0x88] sm:$0xff] %v2423
                  %v2425 = vld [vmem:[%s2403 + $0x50] sm:$0xff]
                  %2426 = vst [vmem:[%s2404 + $0xa0] sm:$0xff] %v2425
                  %v2427 = vld [vmem:[%s2403 + $0x58] sm:$0xff]
                  %2428 = vst [vmem:[%s2404 + $0xa8] sm:$0xff] %v2427
                  %v2429 = vld [vmem:[%s2403 + $0x60] sm:$0xff]
                  %2430 = vst [vmem:[%s2404 + $0xc0] sm:$0xff] %v2429
                  %v2431 = vld [vmem:[%s2403 + $0x68] sm:$0xff]
                  %2432 = vst [vmem:[%s2404 + $0xc8] sm:$0xff] %v2431
                  %v2433 = vld [vmem:[%s2403 + $0x70] sm:$0xff]
                  %2434 = vst [vmem:[%s2404 + $0xe0] sm:$0xff] %v2433
                  %v2435 = vld [vmem:[%s2403 + $0x78] sm:$0xff]
                  %2436 = vst [vmem:[%s2404 + $0xe8] sm:$0xff] %v2435
                  %v2437 = vld [vmem:[%s2403 + $0x80] sm:$0xff]
                  %2438 = vst [vmem:[%s2404 + $0x100] sm:$0xff] %v2437
                  %v2439 = vld [vmem:[%s2403 + $0x88] sm:$0xff]
                  %2440 = vst [vmem:[%s2404 + $0x108] sm:$0xff] %v2439
                  %v2441 = vld [vmem:[%s2403 + $0x90] sm:$0xff]
                  %2442 = vst [vmem:[%s2404 + $0x120] sm:$0xff] %v2441
                  %v2443 = vld [vmem:[%s2403 + $0x98] sm:$0xff]
                  %2444 = vst [vmem:[%s2404 + $0x128] sm:$0xff] %v2443
                  %v2445 = vld [vmem:[%s2403 + $0xa0] sm:$0xff]
                  %2446 = vst [vmem:[%s2404 + $0x140] sm:$0xff] %v2445
                  %v2447 = vld [vmem:[%s2403 + $0xa8] sm:$0xff]
                  %2448 = vst [vmem:[%s2404 + $0x148] sm:$0xff] %v2447
                  %v2449 = vld [vmem:[%s2403 + $0xb0] sm:$0xff]
                  %2450 = vst [vmem:[%s2404 + $0x160] sm:$0xff] %v2449
                  %v2451 = vld [vmem:[%s2403 + $0xb8] sm:$0xff]
                  %2452 = vst [vmem:[%s2404 + $0x168] sm:$0xff] %v2451
                  %v2453 = vld [vmem:[%s2403 + $0xc0] sm:$0xff]
                  %2454 = vst [vmem:[%s2404 + $0x180] sm:$0xff] %v2453
                  %v2455 = vld [vmem:[%s2403 + $0xc8] sm:$0xff]
                  %2456 = vst [vmem:[%s2404 + $0x188] sm:$0xff] %v2455
                  %v2457 = vld [vmem:[%s2403 + $0xd0] sm:$0xff]
                  %2458 = vst [vmem:[%s2404 + $0x1a0] sm:$0xff] %v2457
                  %v2459 = vld [vmem:[%s2403 + $0xd8] sm:$0xff]
                  %2460 = vst [vmem:[%s2404 + $0x1a8] sm:$0xff] %v2459
                  %v2461 = vld [vmem:[%s2403 + $0xe0] sm:$0xff]
                  %2462 = vst [vmem:[%s2404 + $0x1c0] sm:$0xff] %v2461
                  %v2463 = vld [vmem:[%s2403 + $0xe8] sm:$0xff]
                  %2464 = vst [vmem:[%s2404 + $0x1c8] sm:$0xff] %v2463
                  %v2465 = vld [vmem:[%s2403 + $0xf0] sm:$0xff]
                  %2466 = vst [vmem:[%s2404 + $0x1e0] sm:$0xff] %v2465
                  %v2467 = vld [vmem:[%s2403 + $0xf8] sm:$0xff]
                  %2468 = vst [vmem:[%s2404 + $0x1e8] sm:$0xff] %v2467
                $region64: #{tpu_custom_call.1} parent=58 // loop_footer
                  %s2402 = sadd.s32 1, %s2398
                $region65: #{tpu_custom_call.1} parent=58 // loop_footer_branch
                  %2397 = sbr.rel target = $region61
                $region66: #{tpu_custom_call.1} parent=58 // loop_exit
                  _
              $region59: #{tpu_custom_call.1} parent=43 // pred_fallthru
                _
              // Predicated region
              $region67: #{tpu_custom_call.1} parent=43 // pred_check
                _
              $region68: #{tpu_custom_call.1} parent=43 // pred_check_branch
                %2470 = sbr.rel target = $region70
              $region69: #{tpu_custom_call.1} parent=43 // pred_region
                _
              $region70: #{tpu_custom_call.1} parent=43 // pred_fallthru
                _
            $region44: #{tpu_custom_call.1} parent=39 // pred_fallthru
              _
            // Predicated region
            $region45: #{tpu_custom_call.1} parent=39 // pred_check
              _
            $region46: #{tpu_custom_call.1} parent=39 // pred_check_branch
              %2321 = sbr.rel target = $region48
            $region47: #{tpu_custom_call.1} parent=39 // pred_region
              loop: start=0, step=1, limit=1
              $region49: #{tpu_custom_call.1} parent=47 // loop_pre_header
                _
              $region50: #{tpu_custom_call.1} parent=47 // loop_header
                %s2324 = sphi 0, %s2328
                %p2325 = scmp.ge.s32.totalorder %s2324, 1
                %s2329 = sphi %s2307, %s2307
                %s2330 = sphi %s2315, %s2315
              $region51: #{tpu_custom_call.1} parent=47 // loop_header_branch
                %2327 = sbr.rel (%p2325) target = $region55
              $region52: #{tpu_custom_call.1} parent=47 // loop_body
                %v2331 = vld [vmem:[%s2329] sm:$0xff]
                %2332 = vst [vmem:[%s2330] sm:$0xff] %v2331
                %v2333 = vld [vmem:[%s2329 + $0x8] sm:$0xff]
                %2334 = vst [vmem:[%s2330 + $0x8] sm:$0xff] %v2333
                %v2335 = vld [vmem:[%s2329 + $0x10] sm:$0xff]
                %2336 = vst [vmem:[%s2330 + $0x20] sm:$0xff] %v2335
                %v2337 = vld [vmem:[%s2329 + $0x18] sm:$0xff]
                %2338 = vst [vmem:[%s2330 + $0x28] sm:$0xff] %v2337
                %v2339 = vld [vmem:[%s2329 + $0x20] sm:$0xff]
                %2340 = vst [vmem:[%s2330 + $0x40] sm:$0xff] %v2339
                %v2341 = vld [vmem:[%s2329 + $0x28] sm:$0xff]
                %2342 = vst [vmem:[%s2330 + $0x48] sm:$0xff] %v2341
                %v2343 = vld [vmem:[%s2329 + $0x30] sm:$0xff]
                %2344 = vst [vmem:[%s2330 + $0x60] sm:$0xff] %v2343
                %v2345 = vld [vmem:[%s2329 + $0x38] sm:$0xff]
                %2346 = vst [vmem:[%s2330 + $0x68] sm:$0xff] %v2345
                %v2347 = vld [vmem:[%s2329 + $0x40] sm:$0xff]
                %2348 = vst [vmem:[%s2330 + $0x80] sm:$0xff] %v2347
                %v2349 = vld [vmem:[%s2329 + $0x48] sm:$0xff]
                %2350 = vst [vmem:[%s2330 + $0x88] sm:$0xff] %v2349
                %v2351 = vld [vmem:[%s2329 + $0x50] sm:$0xff]
                %2352 = vst [vmem:[%s2330 + $0xa0] sm:$0xff] %v2351
                %v2353 = vld [vmem:[%s2329 + $0x58] sm:$0xff]
                %2354 = vst [vmem:[%s2330 + $0xa8] sm:$0xff] %v2353
                %v2355 = vld [vmem:[%s2329 + $0x60] sm:$0xff]
                %2356 = vst [vmem:[%s2330 + $0xc0] sm:$0xff] %v2355
                %v2357 = vld [vmem:[%s2329 + $0x68] sm:$0xff]
                %2358 = vst [vmem:[%s2330 + $0xc8] sm:$0xff] %v2357
                %v2359 = vld [vmem:[%s2329 + $0x70] sm:$0xff]
                %2360 = vst [vmem:[%s2330 + $0xe0] sm:$0xff] %v2359
                %v2361 = vld [vmem:[%s2329 + $0x78] sm:$0xff]
                %2362 = vst [vmem:[%s2330 + $0xe8] sm:$0xff] %v2361
                %v2363 = vld [vmem:[%s2329 + $0x80] sm:$0xff]
                %2364 = vst [vmem:[%s2330 + $0x100] sm:$0xff] %v2363
                %v2365 = vld [vmem:[%s2329 + $0x88] sm:$0xff]
                %2366 = vst [vmem:[%s2330 + $0x108] sm:$0xff] %v2365
                %v2367 = vld [vmem:[%s2329 + $0x90] sm:$0xff]
                %2368 = vst [vmem:[%s2330 + $0x120] sm:$0xff] %v2367
                %v2369 = vld [vmem:[%s2329 + $0x98] sm:$0xff]
                %2370 = vst [vmem:[%s2330 + $0x128] sm:$0xff] %v2369
                %v2371 = vld [vmem:[%s2329 + $0xa0] sm:$0xff]
                %2372 = vst [vmem:[%s2330 + $0x140] sm:$0xff] %v2371
                %v2373 = vld [vmem:[%s2329 + $0xa8] sm:$0xff]
                %2374 = vst [vmem:[%s2330 + $0x148] sm:$0xff] %v2373
                %v2375 = vld [vmem:[%s2329 + $0xb0] sm:$0xff]
                %2376 = vst [vmem:[%s2330 + $0x160] sm:$0xff] %v2375
                %v2377 = vld [vmem:[%s2329 + $0xb8] sm:$0xff]
                %2378 = vst [vmem:[%s2330 + $0x168] sm:$0xff] %v2377
                %v2379 = vld [vmem:[%s2329 + $0xc0] sm:$0xff]
                %2380 = vst [vmem:[%s2330 + $0x180] sm:$0xff] %v2379
                %v2381 = vld [vmem:[%s2329 + $0xc8] sm:$0xff]
                %2382 = vst [vmem:[%s2330 + $0x188] sm:$0xff] %v2381
                %v2383 = vld [vmem:[%s2329 + $0xd0] sm:$0xff]
                %2384 = vst [vmem:[%s2330 + $0x1a0] sm:$0xff] %v2383
                %v2385 = vld [vmem:[%s2329 + $0xd8] sm:$0xff]
                %2386 = vst [vmem:[%s2330 + $0x1a8] sm:$0xff] %v2385
                %v2387 = vld [vmem:[%s2329 + $0xe0] sm:$0xff]
                %2388 = vst [vmem:[%s2330 + $0x1c0] sm:$0xff] %v2387
                %v2389 = vld [vmem:[%s2329 + $0xe8] sm:$0xff]
                %2390 = vst [vmem:[%s2330 + $0x1c8] sm:$0xff] %v2389
                %v2391 = vld [vmem:[%s2329 + $0xf0] sm:$0xff]
                %2392 = vst [vmem:[%s2330 + $0x1e0] sm:$0xff] %v2391
                %v2393 = vld [vmem:[%s2329 + $0xf8] sm:$0xff]
                %2394 = vst [vmem:[%s2330 + $0x1e8] sm:$0xff] %v2393
              $region53: #{tpu_custom_call.1} parent=47 // loop_footer
                %s2328 = sadd.s32 1, %s2324
              $region54: #{tpu_custom_call.1} parent=47 // loop_footer_branch
                %2323 = sbr.rel target = $region50
              $region55: #{tpu_custom_call.1} parent=47 // loop_exit
                _
            $region48: #{tpu_custom_call.1} parent=39 // pred_fallthru
              _
          $region40: #{tpu_custom_call.1} parent=35 // pred_fallthru
            _
          %2471 = vnop
        $region36: #{tpu_custom_call.1} parent=31 // pred_fallthru
          _
      $region32: #{tpu_custom_call.1} parent=5 // pred_fallthru
        _
      %p2472 = scmp.le.s32.totalorder 2, %s9
      // Predicated region
      $region71: #{tpu_custom_call.1} parent=5 // pred_check
        %p2473 = pneg %p2472
      $region72: #{tpu_custom_call.1} parent=5 // pred_check_branch
        %2475 = sbr.rel (%p2473) target = $region74
      $region73: #{tpu_custom_call.1} parent=5 // pred_region
        %s2476 = ssub.s32 %s9, 2
        // Predicated region
        $region75: #{tpu_custom_call.1} parent=73 // pred_check
          %p2477 = pneg %p125
        $region76: #{tpu_custom_call.1} parent=73 // pred_check_branch
          %2479 = sbr.rel (%p2477) target = $region78
        $region77: #{tpu_custom_call.1} parent=73 // pred_region
          %s2480 = sand.u32 %s110, 1
          %s2481 = sand.u32 %s110, 1
          %s2482 = smul.addr %s2481, 256
          %s2483 = scalar_lea.vmem [#allocation3], %s2482
        $region78: #{tpu_custom_call.1} parent=73 // pred_fallthru
          _
      $region74: #{tpu_custom_call.1} parent=5 // pred_fallthru
        _
    $region6: #{tpu_custom_call.1} parent=1 // loop_footer
      %s13 = sadd.s32 1, %s9
    $region7: #{tpu_custom_call.1} parent=1 // loop_footer_branch
      %8 = sbr.rel target = $region3
    $region8: #{tpu_custom_call.1} parent=1 // loop_exit
      _

</llo_original>
